<compile_context>
chip_gen: v5e
topology: v5e:2x2
jax: 0.10.0
libtpu: 0.0.40
codegen_flags: <defaults>
</compile_context>

<pallas_src>
import functools

import jax
import jax.numpy as jnp
import numpy as np
from jax.experimental import pallas as pl
from jax.experimental.pallas import tpu as pltpu


# ----------------------------------------------------------------------------
# JAX glue: ball query (pointnet2 semantics) and reference grouping
# ----------------------------------------------------------------------------
def ball_query_idx(xyz_t, radius, nsample):
    """xyz_t: [B, N, 3] -> idx [B, N, nsample] int32.

    pointnet2 ball_query: for each center take the FIRST `nsample` points (in
    index order) with squared distance < radius^2, padding remaining slots
    with the first found index.  top_k over integer keys avoids the
    [B, N, N, nsample] one-hot blowup.
    """
    B, N, _ = xyz_t.shape
    sq = jnp.sum(xyz_t * xyz_t, axis=-1)                          # [B, N]
    d2 = (sq[:, :, None] + sq[:, None, :]
          - 2.0 * jnp.einsum('bnd,bmd->bnm', xyz_t, xyz_t))       # [B, N, N]
    in_ball = d2 < (radius * radius)
    j = jnp.arange(N, dtype=jnp.int32)
    invalid_key = jnp.int32(-(N + 1))
    keys = jnp.where(in_ball, -j, invalid_key)                    # [B, N, N]
    top_keys, _ = jax.lax.top_k(keys, nsample)                    # desc keys = asc j
    valid = top_keys > invalid_key
    idx = jnp.where(valid, -top_keys, -top_keys[..., :1])         # pad with first hit
    return idx.astype(jnp.int32)                                  # [B, N, nsample]


def group_from_idx(xyz_t, points_t, idx):
    """QueryAndGroup(use_xyz=True): [B, N, ns, 3+C], relative xyz first."""
    gather = jax.vmap(lambda pts, ind: pts[ind])                  # [N,D],[N,ns]->[N,ns,D]
    gxyz = gather(xyz_t, idx) - xyz_t[:, :, None, :]              # [B, N, ns, 3]
    gpts = gather(points_t, idx)                                  # [B, N, ns, C]
    return jnp.concatenate([gxyz, gpts], axis=-1)


# ----------------------------------------------------------------------------
# Host-side parameter prep
# ----------------------------------------------------------------------------
def _fold_bn(params, pad_in_to=None):
    """(W [Cout,Cin], scale, shift) -> (W*scale bf16, shift f32 column).

    The first layer's input columns are zero-padded to `pad_in_to` so the
    kernel operand is sublane-aligned.
    """
    folded = []
    for li, (w, sc, sh) in enumerate(params):
        if li == 0 and pad_in_to is not None and w.shape[1] < pad_in_to:
            w = jnp.pad(w, ((0, 0), (0, pad_in_to - w.shape[1])))
        wf = (w * sc[:, None]).astype(jnp.bfloat16)
        folded.append((wf, sh.reshape(-1, 1).astype(jnp.float32)))
    return folded


def _flat_params(folded1, folded2):
    flat = []
    for wf, sh in folded1 + folded2:
        flat += [wf, sh]
    return flat


def _pick_tn(N, B):
    """Point-tile size: multiple of 128 (cap 2048) dividing N, keeping the
    grid B*(N//TN) >= 2 so both v7x TensorCores get work.  Falls back to the
    full N for toy / unaligned shapes (production callers should pad N to a
    multiple of 128)."""
    if N % 128 != 0:
        return N
    for tn in (2048, 1024, 512, 256, 128):
        if N % tn == 0 and B * (N // tn) >= 2:
            return tn
    return 128


# ----------------------------------------------------------------------------
# Pallas kernels
# ----------------------------------------------------------------------------
def _plf_gather_kernel(idx_ref, src_ref, *args, num1, num2, nsample, tn):
    """Per (batch, point-tile): VMEM gather -> MLP1 -> max over samples -> MLP2.

    idx_ref: (1, 1, 1, ns*tn) int32, flattened neighbour index, m = s*tn + n.
    src_ref: (1, C0p, N)  f32, full per-batch point slab (xyz + feat, padded).
    out_ref: (1, c_out, tn).
    """
    out_ref = args[-1]
    params = args[:-1]
    c0p = src_ref.shape[1]
    m = nsample * tn

    w1 = [params[2 * li][...] for li in range(num1)]              # (Cout, Cin) bf16
    s1 = [params[2 * li + 1][...] for li in range(num1)]          # (Cout, 1)  f32
    w2 = [params[2 * (num1 + li)][...] for li in range(num2)]
    s2 = [params[2 * (num1 + li) + 1][...] for li in range(num2)]

    # In-VMEM gather of neighbour columns: only unique data is streamed from
    # HBM (src once per batch, idx per tile) -- no ns-replicated tensor.
    src = src_ref[0]                                              # (C0p, N) f32
    idx = idx_ref[0, 0]                                           # (1, m) int32
    idx_b = jnp.broadcast_to(idx, (c0p, m))
    hg = jnp.take_along_axis(src, idx_b, axis=1,
                             mode="promise_in_bounds")            # (C0p, m) f32

    # Relative xyz: subtract this tile's own (center) coords from rows 0..2.
    # Column m = s*tn + n -> center is point n of the current tile.
    start = pl.multiple_of(pl.program_id(1) * tn, tn)
    cen = src_ref[0, 0:3, pl.ds(start, tn)]                       # (3, tn) f32
    rel = hg[0:3, :] - jnp.tile(cen, (1, nsample))                # (3, m)
    h = jnp.concatenate([rel, hg[3:, :]], axis=0).astype(jnp.bfloat16)

    # MLP1: one dot per layer over ALL samples (lane-dense ns*tn columns).
    for li in range(num1):
        z = jnp.dot(w1[li], h, preferred_element_type=jnp.float32)
        h = jnp.maximum(z + s1[li], 0.0).astype(jnp.bfloat16)

    # Max-pool over the sample axis: ns static lane-slices of width tn.
    g = h[:, 0:tn]
    for s in range(1, nsample):
        g = jnp.maximum(g, h[:, s * tn:(s + 1) * tn])

    # MLP2 on the pooled (Cmid, tn) slab; last layer stays f32.
    for li in range(num2):
        z = jnp.dot(w2[li], g, preferred_element_type=jnp.float32)
        a = jnp.maximum(z + s2[li], 0.0)
        g = a.astype(jnp.bfloat16) if li < num2 - 1 else a

    out_ref[0] = g.astype(out_ref.dtype)                          # (c_out, tn)


def _plf_pregathered_kernel(x_ref, *args, num1, num2, nsample):
    """Fallback kernel: x_ref is the pre-gathered (1, ns, C0p, tn) block."""
    out_ref = args[-1]
    params = args[:-1]
    tn = x_ref.shape[3]

    w1 = [params[2 * li][...] for li in range(num1)]
    s1 = [params[2 * li + 1][...] for li in range(num1)]
    w2 = [params[2 * (num1 + li)][...] for li in range(num2)]
    s2 = [params[2 * (num1 + li) + 1][...] for li in range(num2)]
    # Hoist shift broadcasts out of the unrolled sample loop (no CSE of
    # broadcast_in_dim inside the unroll).
    s1b = [jnp.broadcast_to(s1[li], (w1[li].shape[0], tn)) for li in range(num1)]

    hm = None
    for s in range(nsample):
        h = x_ref[0, s]                                           # (C0p, tn) bf16
        for li in range(num1):
            z = jnp.dot(w1[li], h, preferred_element_type=jnp.float32)
            h = jnp.maximum(z + s1b[li], 0.0).astype(jnp.bfloat16)
        hm = h if hm is None else jnp.maximum(hm, h)              # fused max-pool

    g = hm
    for li in range(num2):
        z = jnp.dot(w2[li], g, preferred_element_type=jnp.float32)
        a = jnp.maximum(z + s2[li], 0.0)
        g = a.astype(jnp.bfloat16) if li < num2 - 1 else a
    out_ref[0] = g.astype(out_ref.dtype)


# ----------------------------------------------------------------------------
# pallas_call wrappers
# ----------------------------------------------------------------------------
def _plf_pallas_gather(idx_t, src, folded1, folded2, TN, nsample,
                       out_dtype=jnp.float32):
    """idx_t: [B, N//TN, 1, ns*TN] int32, src: [B, C0p, N] f32 -> [B, c_out, N]."""
    B, C0p, N = src.shape
    NT = N // TN
    M = nsample * TN
    num1, num2 = len(folded1), len(folded2)
    c_out = folded2[-1][0].shape[0]
    flat = _flat_params(folded1, folded2)

    in_specs = [
        pl.BlockSpec((1, 1, 1, M), lambda b, n: (b, n, 0, 0)),    # per-tile indices
        pl.BlockSpec((1, C0p, N), lambda b, n: (b, 0, 0)),        # per-batch slab (DMA'd once/b)
    ]
    in_specs += [pl.BlockSpec(arr.shape, lambda b, n, _nd=arr.ndim: (0,) * _nd)
                 for arr in flat]

    kernel = functools.partial(_plf_gather_kernel, num1=num1, num2=num2,
                               nsample=nsample, tn=TN)
    return pl.pallas_call(
        kernel,
        out_shape=jax.ShapeDtypeStruct((B, c_out, N), out_dtype),
        grid_spec=pltpu.PrefetchScalarGridSpec(
            num_scalar_prefetch=0,
            grid=(B, NT),
            in_specs=in_specs,
            out_specs=pl.BlockSpec((1, c_out, TN), lambda b, n: (b, 0, n)),
        ),
        compiler_params=pltpu.CompilerParams(
            dimension_semantics=("parallel", "parallel"),
            vmem_limit_bytes=32 * 1024 * 1024,
        ),
    )(idx_t, src, *flat)


def _plf_pallas_pregathered(x_g, folded1, folded2, TN, out_dtype=jnp.float32):
    """Fallback: x_g [B, nsample, C0p, N] bf16 -> [B, c_out, N]."""
    B, ns, C0p, N = x_g.shape
    num1, num2 = len(folded1), len(folded2)
    c_out = folded2[-1][0].shape[0]
    flat = _flat_params(folded1, folded2)

    in_specs = [pl.BlockSpec((1, ns, C0p, TN), lambda b, n: (b, 0, 0, n))]
    in_specs += [pl.BlockSpec(arr.shape, lambda b, n, _nd=arr.ndim: (0,) * _nd)
                 for arr in flat]
    kernel = functools.partial(_plf_pregathered_kernel, num1=num1, num2=num2,
                               nsample=ns)
    return pl.pallas_call(
        kernel,
        out_shape=jax.ShapeDtypeStruct((B, c_out, N), out_dtype),
        grid_spec=pltpu.PrefetchScalarGridSpec(
            num_scalar_prefetch=0,
            grid=(B, N // TN),
            in_specs=in_specs,
            out_specs=pl.BlockSpec((1, c_out, TN), lambda b, n: (b, 0, n)),
        ),
        compiler_params=pltpu.CompilerParams(
            dimension_semantics=("parallel", "parallel"),
            vmem_limit_bytes=32 * 1024 * 1024,
        ),
    )(x_g, *flat)


# ----------------------------------------------------------------------------
# PointLocalFeature forward (one scale) and MultiScaleEncoder forward
# ----------------------------------------------------------------------------
_GATHER_OK = None  # None = not probed yet; True/False after the first call.


def point_local_feature(xyz, points, radius, nsample, params1, params2):
    """xyz: [B, 3, N], points: [B, C_in, N] -> [B, mlp2[-1], N] (PyTorch layout)."""
    global _GATHER_OK
    B, _, N = xyz.shape
    C_in = points.shape[1]
    C0 = 3 + C_in
    C0p = ((C0 + 7) // 8) * 8                                     # sublane-aligned channels
    TN = _pick_tn(N, B)
    assert N % TN == 0, "point count must be divisible by the tile size"

    xyz_t = jnp.transpose(xyz, (0, 2, 1))                         # [B, N, 3]
    idx = ball_query_idx(xyz_t, radius, nsample)                  # [B, N, ns] int32
    folded1 = _fold_bn(params1, pad_in_to=C0p)
    folded2 = _fold_bn(params2)

    def run_gather():
        src = jnp.concatenate([xyz, points], axis=1).astype(jnp.float32)
        if C0p > C0:
            src = jnp.pad(src, ((0, 0), (0, C0p - C0), (0, 0)))   # [B, C0p, N]
        NT = N // TN
        idx_t = (idx.reshape(B, NT, TN, nsample)                  # per-tile, sample-major
                 .transpose(0, 1, 3, 2)
                 .reshape(B, NT, 1, nsample * TN))
        return _plf_pallas_gather(idx_t, src, folded1, folded2, TN, nsample)

    def run_pregathered():
        points_t = jnp.transpose(points, (0, 2, 1))
        grouped = group_from_idx(xyz_t, points_t, idx)            # [B, N, ns, C0] f32
        if C0p > C0:
            grouped = jnp.pad(grouped, ((0, 0), (0, 0), (0, 0), (0, C0p - C0)))
        x_g = jnp.transpose(grouped, (0, 2, 3, 1)).astype(jnp.bfloat16)
        return _plf_pallas_pregathered(x_g, folded1, folded2, TN)

    if _GATHER_OK is None:
        # One-time capability probe: the in-kernel VMEM gather needs Mosaic's
        # gather lowering; if it is unavailable or numerically off, fall back
        # permanently to the pre-gathered-input kernel.
        want = jax.block_until_ready(run_pregathered())
        try:
            got = jax.block_until_ready(run_gather())
            _GATHER_OK = bool(np.allclose(np.asarray(got), np.asarray(want),
                                          rtol=1e-3, atol=1e-3))
        except Exception:
            _GATHER_OK = False
        return got if _GATHER_OK else want
    return run_gather() if _GATHER_OK else run_pregathered()


def multi_scale_encoder(xyz, features, radii, nsamples, all_params):
    """Matches MultiScaleEncoder.forward: concat per-scale features on channels."""
    outs = [point_local_feature(xyz, features, r, ns, p1, p2)
            for r, ns, (p1, p2) in zip(radii, nsamples, all_params)]
    return jnp.concatenate(outs, axis=1)                          # [B, num_scales*c_out, N]


# ----------------------------------------------------------------------------
# Pure-JAX reference (same math, same bf16 quantization points)
# ----------------------------------------------------------------------------
def reference_forward(xyz, points, radius, nsample, params1, params2):
    xyz_t = jnp.transpose(xyz, (0, 2, 1))
    points_t = jnp.transpose(points, (0, 2, 1))
    idx = ball_query_idx(xyz_t, radius, nsample)
    g = group_from_idx(xyz_t, points_t, idx)                      # [B, N, ns, C0] f32
    h = g.astype(jnp.bfloat16)
    for w, sc, sh in params1:
        wf = (w * sc[:, None]).astype(jnp.bfloat16)
        z = jnp.einsum('bnsc,oc->bnso', h, wf, preferred_element_type=jnp.float32)
        h = jnp.maximum(z + sh, 0.0).astype(jnp.bfloat16)
    hm = jnp.max(h, axis=2)                                       # [B, N, Cmid]
    num2 = len(params2)
    for li, (w, sc, sh) in enumerate(params2):
        wf = (w * sc[:, None]).astype(jnp.bfloat16)
        z = jnp.einsum('bnc,oc->bno', hm, wf, preferred_element_type=jnp.float32)
        a = jnp.maximum(z + sh, 0.0)
        hm = a.astype(jnp.bfloat16) if li < num2 - 1 else a
    return jnp.transpose(hm, (0, 2, 1)).astype(jnp.float32)       # [B, c_out, N]


def multi_scale_encoder_reference(xyz, features, radii, nsamples, all_params):
    outs = [reference_forward(xyz, features, r, ns, p1, p2)
            for r, ns, (p1, p2) in zip(radii, nsamples, all_params)]
    return jnp.concatenate(outs, axis=1)


# ----------------------------------------------------------------------------
# Deterministic parameter init (Conv2d 1x1 weight + eval-mode BN running stats)
# ----------------------------------------------------------------------------
def init_mlp_params(key, in_channel, channels):
    params = []
    last = in_channel
    eps = 1e-5
    for cout in channels:
        key, kw, kg, kb, km, kv = jax.random.split(key, 6)
        w = jax.random.normal(kw, (cout, last), jnp.float32) / np.sqrt(last)
        gamma = 1.0 + 0.1 * jax.random.normal(kg, (cout,), jnp.float32)
        beta = 0.1 * jax.random.normal(kb, (cout,), jnp.float32)
        mean = 0.1 * jax.random.normal(km, (cout,), jnp.float32)
        var = jnp.abs(jax.random.normal(kv, (cout,), jnp.float32)) + 0.5
        scale = gamma / jnp.sqrt(var + eps)
        shift = beta - mean * scale
        params.append((w, scale, shift))
        last = cout
    return params, key, last


if __name__ == "__main__":
    # Small shapes consistent with the module.
    B, C_in, N = 2, 4, 64
    radii = [0.3, 0.6]
    nsamples = [8, 16]
    mlp, mlp2 = [16, 16, 32], [32, 32]

    key = jax.random.PRNGKey(0)
    kx, kp, kparam = jax.random.split(key, 3)
    xyz = jax.random.uniform(kx, (B, 3, N), jnp.float32)          # [B, 3, N]
    points = jax.random.normal(kp, (B, C_in, N), jnp.float32)     # [B, C_in, N]

    all_params = []
    for _ in radii:
        params1, kparam, last = init_mlp_params(kparam, C_in + 3, mlp)
        params2, kparam, _ = init_mlp_params(kparam, last, mlp2)
        all_params.append((params1, params2))

    out = multi_scale_encoder(xyz, points, radii, nsamples, all_params)
    out = jax.block_until_ready(out)

    ref = multi_scale_encoder_reference(xyz, points, radii, nsamples, all_params)
    np.testing.assert_allclose(np.asarray(out), np.asarray(ref),
                               rtol=1e-2, atol=1e-2)
    assert out.shape == (B, len(radii) * mlp2[-1], N)
    print("KERNEL_OK")
</pallas_src>

<mosaic_0001>
module attributes {stable_mosaic.version = 11 : i64} {
  func.func @_plf_pregathered_kernel(%arg0: i32, %arg1: i32, %arg2: memref<1x8x8x64xbf16, #tpu.memory_space<vmem>>, %arg3: memref<16x8xbf16, #tpu.memory_space<vmem>>, %arg4: memref<16x1xf32, #tpu.memory_space<vmem>>, %arg5: memref<16x16xbf16, #tpu.memory_space<vmem>>, %arg6: memref<16x1xf32, #tpu.memory_space<vmem>>, %arg7: memref<32x16xbf16, #tpu.memory_space<vmem>>, %arg8: memref<32x1xf32, #tpu.memory_space<vmem>>, %arg9: memref<32x32xbf16, #tpu.memory_space<vmem>>, %arg10: memref<32x1xf32, #tpu.memory_space<vmem>>, %arg11: memref<32x32xbf16, #tpu.memory_space<vmem>>, %arg12: memref<32x1xf32, #tpu.memory_space<vmem>>, %arg13: memref<1x32x64xf32, #tpu.memory_space<vmem>>) attributes {dimension_semantics = [#tpu.dimension_semantics<parallel>, #tpu.dimension_semantics<parallel>], iteration_bounds = array<i64: 2, 1>, scalar_prefetch = 0 : i64, scratch_operands = 0 : i64, tpu.core_type = #tpu.core_type<tc>, window_params = [{transform_indices = @transform_0, window_bounds = array<i64: 1, 8, 8, 64>}, {pipeline_mode = #tpu.pipeline_mode<synchronous>, transform_indices = @transform_1, window_bounds = array<i64: 16, 8>}, {pipeline_mode = #tpu.pipeline_mode<synchronous>, transform_indices = @transform_2, window_bounds = array<i64: 16, 1>}, {pipeline_mode = #tpu.pipeline_mode<synchronous>, transform_indices = @transform_3, window_bounds = array<i64: 16, 16>}, {pipeline_mode = #tpu.pipeline_mode<synchronous>, transform_indices = @transform_4, window_bounds = array<i64: 16, 1>}, {pipeline_mode = #tpu.pipeline_mode<synchronous>, transform_indices = @transform_5, window_bounds = array<i64: 32, 16>}, {pipeline_mode = #tpu.pipeline_mode<synchronous>, transform_indices = @transform_6, window_bounds = array<i64: 32, 1>}, {pipeline_mode = #tpu.pipeline_mode<synchronous>, transform_indices = @transform_7, window_bounds = array<i64: 32, 32>}, {pipeline_mode = #tpu.pipeline_mode<synchronous>, transform_indices = @transform_8, window_bounds = array<i64: 32, 1>}, {pipeline_mode = #tpu.pipeline_mode<synchronous>, transform_indices = @transform_9, window_bounds = array<i64: 32, 32>}, {pipeline_mode = #tpu.pipeline_mode<synchronous>, transform_indices = @transform_10, window_bounds = array<i64: 32, 1>}, {transform_indices = @transform_11, window_bounds = array<i64: 1, 32, 64>}]} {
    %c0 = arith.constant 0 : index
    %c0_0 = arith.constant 0 : index
    %0 = vector.load %arg3[%c0, %c0_0] : memref<16x8xbf16, #tpu.memory_space<vmem>>, vector<16x8xbf16>
    %c0_1 = arith.constant 0 : index
    %c0_2 = arith.constant 0 : index
    %1 = vector.load %arg5[%c0_1, %c0_2] : memref<16x16xbf16, #tpu.memory_space<vmem>>, vector<16x16xbf16>
    %c0_3 = arith.constant 0 : index
    %c0_4 = arith.constant 0 : index
    %2 = vector.load %arg7[%c0_3, %c0_4] : memref<32x16xbf16, #tpu.memory_space<vmem>>, vector<32x16xbf16>
    %c0_5 = arith.constant 0 : index
    %c0_6 = arith.constant 0 : index
    %3 = vector.load %arg4[%c0_5, %c0_6] : memref<16x1xf32, #tpu.memory_space<vmem>>, vector<16x1xf32>
    %c0_7 = arith.constant 0 : index
    %c0_8 = arith.constant 0 : index
    %4 = vector.load %arg6[%c0_7, %c0_8] : memref<16x1xf32, #tpu.memory_space<vmem>>, vector<16x1xf32>
    %c0_9 = arith.constant 0 : index
    %c0_10 = arith.constant 0 : index
    %5 = vector.load %arg8[%c0_9, %c0_10] : memref<32x1xf32, #tpu.memory_space<vmem>>, vector<32x1xf32>
    %c0_11 = arith.constant 0 : index
    %c0_12 = arith.constant 0 : index
    %6 = vector.load %arg9[%c0_11, %c0_12] : memref<32x32xbf16, #tpu.memory_space<vmem>>, vector<32x32xbf16>
    %c0_13 = arith.constant 0 : index
    %c0_14 = arith.constant 0 : index
    %7 = vector.load %arg11[%c0_13, %c0_14] : memref<32x32xbf16, #tpu.memory_space<vmem>>, vector<32x32xbf16>
    %c0_15 = arith.constant 0 : index
    %c0_16 = arith.constant 0 : index
    %8 = vector.load %arg10[%c0_15, %c0_16] : memref<32x1xf32, #tpu.memory_space<vmem>>, vector<32x1xf32>
    %c0_17 = arith.constant 0 : index
    %c0_18 = arith.constant 0 : index
    %9 = vector.load %arg12[%c0_17, %c0_18] : memref<32x1xf32, #tpu.memory_space<vmem>>, vector<32x1xf32>
    %10 = vector.shape_cast %3 : vector<16x1xf32> to vector<16x1xf32>
    %11 = vector.broadcast %10 : vector<16x1xf32> to vector<16x64xf32>
    %12 = vector.shape_cast %4 : vector<16x1xf32> to vector<16x1xf32>
    %13 = vector.broadcast %12 : vector<16x1xf32> to vector<16x64xf32>
    %14 = vector.shape_cast %5 : vector<32x1xf32> to vector<32x1xf32>
    %15 = vector.broadcast %14 : vector<32x1xf32> to vector<32x64xf32>
    %c0_19 = arith.constant 0 : index
    %c0_20 = arith.constant 0 : index
    %c0_21 = arith.constant 0 : index
    %c0_22 = arith.constant 0 : index
    %16 = vector.load %arg2[%c0_19, %c0_20, %c0_21, %c0_22] : memref<1x8x8x64xbf16, #tpu.memory_space<vmem>>, vector<1x1x8x64xbf16>
    %17 = vector.shape_cast %16 : vector<1x1x8x64xbf16> to vector<8x64xbf16>
    %cst = arith.constant dense<0.000000e+00> : vector<16x64xf32>
    %18 = tpu.matmul %0, %17, %cst {dimension_numbers = #tpu.dot_dimension_numbers<[1], [0], [0], [1], [0, 0, 1, 1], [], []>} : vector<16x8xbf16>, vector<8x64xbf16>, vector<16x64xf32> -> vector<16x64xf32>
    %19 = arith.addf %18, %11 : vector<16x64xf32>
    %cst_23 = arith.constant 0.000000e+00 : f32
    %20 = vector.broadcast %cst_23 : f32 to vector<16x64xf32>
    %21 = arith.maximumf %19, %20 : vector<16x64xf32>
    %22 = arith.truncf %21 : vector<16x64xf32> to vector<16x64xbf16>
    %cst_24 = arith.constant dense<0.000000e+00> : vector<16x64xf32>
    %23 = tpu.matmul %1, %22, %cst_24 {dimension_numbers = #tpu.dot_dimension_numbers<[1], [0], [0], [1], [0, 0, 1, 1], [], []>} : vector<16x16xbf16>, vector<16x64xbf16>, vector<16x64xf32> -> vector<16x64xf32>
    %24 = arith.addf %23, %13 : vector<16x64xf32>
    %cst_25 = arith.constant 0.000000e+00 : f32
    %25 = vector.broadcast %cst_25 : f32 to vector<16x64xf32>
    %26 = arith.maximumf %24, %25 : vector<16x64xf32>
    %27 = arith.truncf %26 : vector<16x64xf32> to vector<16x64xbf16>
    %cst_26 = arith.constant dense<0.000000e+00> : vector<32x64xf32>
    %28 = tpu.matmul %2, %27, %cst_26 {dimension_numbers = #tpu.dot_dimension_numbers<[1], [0], [0], [1], [0, 0, 1, 1], [], []>} : vector<32x16xbf16>, vector<16x64xbf16>, vector<32x64xf32> -> vector<32x64xf32>
    %29 = arith.addf %28, %15 : vector<32x64xf32>
    %cst_27 = arith.constant 0.000000e+00 : f32
    %30 = vector.broadcast %cst_27 : f32 to vector<32x64xf32>
    %31 = arith.maximumf %29, %30 : vector<32x64xf32>
    %32 = arith.truncf %31 : vector<32x64xf32> to vector<32x64xbf16>
    %c0_28 = arith.constant 0 : index
    %c1 = arith.constant 1 : index
    %c0_29 = arith.constant 0 : index
    %c0_30 = arith.constant 0 : index
    %33 = vector.load %arg2[%c0_28, %c1, %c0_29, %c0_30] : memref<1x8x8x64xbf16, #tpu.memory_space<vmem>>, vector<1x1x8x64xbf16>
    %34 = vector.shape_cast %33 : vector<1x1x8x64xbf16> to vector<8x64xbf16>
    %cst_31 = arith.constant dense<0.000000e+00> : vector<16x64xf32>
    %35 = tpu.matmul %0, %34, %cst_31 {dimension_numbers = #tpu.dot_dimension_numbers<[1], [0], [0], [1], [0, 0, 1, 1], [], []>} : vector<16x8xbf16>, vector<8x64xbf16>, vector<16x64xf32> -> vector<16x64xf32>
    %36 = arith.addf %35, %11 : vector<16x64xf32>
    %cst_32 = arith.constant 0.000000e+00 : f32
    %37 = vector.broadcast %cst_32 : f32 to vector<16x64xf32>
    %38 = arith.maximumf %36, %37 : vector<16x64xf32>
    %39 = arith.truncf %38 : vector<16x64xf32> to vector<16x64xbf16>
    %cst_33 = arith.constant dense<0.000000e+00> : vector<16x64xf32>
    %40 = tpu.matmul %1, %39, %cst_33 {dimension_numbers = #tpu.dot_dimension_numbers<[1], [0], [0], [1], [0, 0, 1, 1], [], []>} : vector<16x16xbf16>, vector<16x64xbf16>, vector<16x64xf32> -> vector<16x64xf32>
    %41 = arith.addf %40, %13 : vector<16x64xf32>
    %cst_34 = arith.constant 0.000000e+00 : f32
    %42 = vector.broadcast %cst_34 : f32 to vector<16x64xf32>
    %43 = arith.maximumf %41, %42 : vector<16x64xf32>
    %44 = arith.truncf %43 : vector<16x64xf32> to vector<16x64xbf16>
    %cst_35 = arith.constant dense<0.000000e+00> : vector<32x64xf32>
    %45 = tpu.matmul %2, %44, %cst_35 {dimension_numbers = #tpu.dot_dimension_numbers<[1], [0], [0], [1], [0, 0, 1, 1], [], []>} : vector<32x16xbf16>, vector<16x64xbf16>, vector<32x64xf32> -> vector<32x64xf32>
    %46 = arith.addf %45, %15 : vector<32x64xf32>
    %cst_36 = arith.constant 0.000000e+00 : f32
    %47 = vector.broadcast %cst_36 : f32 to vector<32x64xf32>
    %48 = arith.maximumf %46, %47 : vector<32x64xf32>
    %49 = arith.truncf %48 : vector<32x64xf32> to vector<32x64xbf16>
    %50 = arith.maximumf %32, %49 : vector<32x64xbf16>
    %c0_37 = arith.constant 0 : index
    %c2 = arith.constant 2 : index
    %c0_38 = arith.constant 0 : index
    %c0_39 = arith.constant 0 : index
    %51 = vector.load %arg2[%c0_37, %c2, %c0_38, %c0_39] : memref<1x8x8x64xbf16, #tpu.memory_space<vmem>>, vector<1x1x8x64xbf16>
    %52 = vector.shape_cast %51 : vector<1x1x8x64xbf16> to vector<8x64xbf16>
    %cst_40 = arith.constant dense<0.000000e+00> : vector<16x64xf32>
    %53 = tpu.matmul %0, %52, %cst_40 {dimension_numbers = #tpu.dot_dimension_numbers<[1], [0], [0], [1], [0, 0, 1, 1], [], []>} : vector<16x8xbf16>, vector<8x64xbf16>, vector<16x64xf32> -> vector<16x64xf32>
    %54 = arith.addf %53, %11 : vector<16x64xf32>
    %cst_41 = arith.constant 0.000000e+00 : f32
    %55 = vector.broadcast %cst_41 : f32 to vector<16x64xf32>
    %56 = arith.maximumf %54, %55 : vector<16x64xf32>
    %57 = arith.truncf %56 : vector<16x64xf32> to vector<16x64xbf16>
    %cst_42 = arith.constant dense<0.000000e+00> : vector<16x64xf32>
    %58 = tpu.matmul %1, %57, %cst_42 {dimension_numbers = #tpu.dot_dimension_numbers<[1], [0], [0], [1], [0, 0, 1, 1], [], []>} : vector<16x16xbf16>, vector<16x64xbf16>, vector<16x64xf32> -> vector<16x64xf32>
    %59 = arith.addf %58, %13 : vector<16x64xf32>
    %cst_43 = arith.constant 0.000000e+00 : f32
    %60 = vector.broadcast %cst_43 : f32 to vector<16x64xf32>
    %61 = arith.maximumf %59, %60 : vector<16x64xf32>
    %62 = arith.truncf %61 : vector<16x64xf32> to vector<16x64xbf16>
    %cst_44 = arith.constant dense<0.000000e+00> : vector<32x64xf32>
    %63 = tpu.matmul %2, %62, %cst_44 {dimension_numbers = #tpu.dot_dimension_numbers<[1], [0], [0], [1], [0, 0, 1, 1], [], []>} : vector<32x16xbf16>, vector<16x64xbf16>, vector<32x64xf32> -> vector<32x64xf32>
    %64 = arith.addf %63, %15 : vector<32x64xf32>
    %cst_45 = arith.constant 0.000000e+00 : f32
    %65 = vector.broadcast %cst_45 : f32 to vector<32x64xf32>
    %66 = arith.maximumf %64, %65 : vector<32x64xf32>
    %67 = arith.truncf %66 : vector<32x64xf32> to vector<32x64xbf16>
    %68 = arith.maximumf %50, %67 : vector<32x64xbf16>
    %c0_46 = arith.constant 0 : index
    %c3 = arith.constant 3 : index
    %c0_47 = arith.constant 0 : index
    %c0_48 = arith.constant 0 : index
    %69 = vector.load %arg2[%c0_46, %c3, %c0_47, %c0_48] : memref<1x8x8x64xbf16, #tpu.memory_space<vmem>>, vector<1x1x8x64xbf16>
    %70 = vector.shape_cast %69 : vector<1x1x8x64xbf16> to vector<8x64xbf16>
    %cst_49 = arith.constant dense<0.000000e+00> : vector<16x64xf32>
    %71 = tpu.matmul %0, %70, %cst_49 {dimension_numbers = #tpu.dot_dimension_numbers<[1], [0], [0], [1], [0, 0, 1, 1], [], []>} : vector<16x8xbf16>, vector<8x64xbf16>, vector<16x64xf32> -> vector<16x64xf32>
    %72 = arith.addf %71, %11 : vector<16x64xf32>
    %cst_50 = arith.constant 0.000000e+00 : f32
    %73 = vector.broadcast %cst_50 : f32 to vector<16x64xf32>
    %74 = arith.maximumf %72, %73 : vector<16x64xf32>
    %75 = arith.truncf %74 : vector<16x64xf32> to vector<16x64xbf16>
    %cst_51 = arith.constant dense<0.000000e+00> : vector<16x64xf32>
    %76 = tpu.matmul %1, %75, %cst_51 {dimension_numbers = #tpu.dot_dimension_numbers<[1], [0], [0], [1], [0, 0, 1, 1], [], []>} : vector<16x16xbf16>, vector<16x64xbf16>, vector<16x64xf32> -> vector<16x64xf32>
    %77 = arith.addf %76, %13 : vector<16x64xf32>
    %cst_52 = arith.constant 0.000000e+00 : f32
    %78 = vector.broadcast %cst_52 : f32 to vector<16x64xf32>
    %79 = arith.maximumf %77, %78 : vector<16x64xf32>
    %80 = arith.truncf %79 : vector<16x64xf32> to vector<16x64xbf16>
    %cst_53 = arith.constant dense<0.000000e+00> : vector<32x64xf32>
    %81 = tpu.matmul %2, %80, %cst_53 {dimension_numbers = #tpu.dot_dimension_numbers<[1], [0], [0], [1], [0, 0, 1, 1], [], []>} : vector<32x16xbf16>, vector<16x64xbf16>, vector<32x64xf32> -> vector<32x64xf32>
    %82 = arith.addf %81, %15 : vector<32x64xf32>
    %cst_54 = arith.constant 0.000000e+00 : f32
    %83 = vector.broadcast %cst_54 : f32 to vector<32x64xf32>
    %84 = arith.maximumf %82, %83 : vector<32x64xf32>
    %85 = arith.truncf %84 : vector<32x64xf32> to vector<32x64xbf16>
    %86 = arith.maximumf %68, %85 : vector<32x64xbf16>
    %c0_55 = arith.constant 0 : index
    %c4 = arith.constant 4 : index
    %c0_56 = arith.constant 0 : index
    %c0_57 = arith.constant 0 : index
    %87 = vector.load %arg2[%c0_55, %c4, %c0_56, %c0_57] : memref<1x8x8x64xbf16, #tpu.memory_space<vmem>>, vector<1x1x8x64xbf16>
    %88 = vector.shape_cast %87 : vector<1x1x8x64xbf16> to vector<8x64xbf16>
    %cst_58 = arith.constant dense<0.000000e+00> : vector<16x64xf32>
    %89 = tpu.matmul %0, %88, %cst_58 {dimension_numbers = #tpu.dot_dimension_numbers<[1], [0], [0], [1], [0, 0, 1, 1], [], []>} : vector<16x8xbf16>, vector<8x64xbf16>, vector<16x64xf32> -> vector<16x64xf32>
    %90 = arith.addf %89, %11 : vector<16x64xf32>
    %cst_59 = arith.constant 0.000000e+00 : f32
    %91 = vector.broadcast %cst_59 : f32 to vector<16x64xf32>
    %92 = arith.maximumf %90, %91 : vector<16x64xf32>
    %93 = arith.truncf %92 : vector<16x64xf32> to vector<16x64xbf16>
    %cst_60 = arith.constant dense<0.000000e+00> : vector<16x64xf32>
    %94 = tpu.matmul %1, %93, %cst_60 {dimension_numbers = #tpu.dot_dimension_numbers<[1], [0], [0], [1], [0, 0, 1, 1], [], []>} : vector<16x16xbf16>, vector<16x64xbf16>, vector<16x64xf32> -> vector<16x64xf32>
    %95 = arith.addf %94, %13 : vector<16x64xf32>
    %cst_61 = arith.constant 0.000000e+00 : f32
    %96 = vector.broadcast %cst_61 : f32 to vector<16x64xf32>
    %97 = arith.maximumf %95, %96 : vector<16x64xf32>
    %98 = arith.truncf %97 : vector<16x64xf32> to vector<16x64xbf16>
    %cst_62 = arith.constant dense<0.000000e+00> : vector<32x64xf32>
    %99 = tpu.matmul %2, %98, %cst_62 {dimension_numbers = #tpu.dot_dimension_numbers<[1], [0], [0], [1], [0, 0, 1, 1], [], []>} : vector<32x16xbf16>, vector<16x64xbf16>, vector<32x64xf32> -> vector<32x64xf32>
    %100 = arith.addf %99, %15 : vector<32x64xf32>
    %cst_63 = arith.constant 0.000000e+00 : f32
    %101 = vector.broadcast %cst_63 : f32 to vector<32x64xf32>
    %102 = arith.maximumf %100, %101 : vector<32x64xf32>
    %103 = arith.truncf %102 : vector<32x64xf32> to vector<32x64xbf16>
    %104 = arith.maximumf %86, %103 : vector<32x64xbf16>
    %c0_64 = arith.constant 0 : index
    %c5 = arith.constant 5 : index
    %c0_65 = arith.constant 0 : index
    %c0_66 = arith.constant 0 : index
    %105 = vector.load %arg2[%c0_64, %c5, %c0_65, %c0_66] : memref<1x8x8x64xbf16, #tpu.memory_space<vmem>>, vector<1x1x8x64xbf16>
    %106 = vector.shape_cast %105 : vector<1x1x8x64xbf16> to vector<8x64xbf16>
    %cst_67 = arith.constant dense<0.000000e+00> : vector<16x64xf32>
    %107 = tpu.matmul %0, %106, %cst_67 {dimension_numbers = #tpu.dot_dimension_numbers<[1], [0], [0], [1], [0, 0, 1, 1], [], []>} : vector<16x8xbf16>, vector<8x64xbf16>, vector<16x64xf32> -> vector<16x64xf32>
    %108 = arith.addf %107, %11 : vector<16x64xf32>
    %cst_68 = arith.constant 0.000000e+00 : f32
    %109 = vector.broadcast %cst_68 : f32 to vector<16x64xf32>
    %110 = arith.maximumf %108, %109 : vector<16x64xf32>
    %111 = arith.truncf %110 : vector<16x64xf32> to vector<16x64xbf16>
    %cst_69 = arith.constant dense<0.000000e+00> : vector<16x64xf32>
    %112 = tpu.matmul %1, %111, %cst_69 {dimension_numbers = #tpu.dot_dimension_numbers<[1], [0], [0], [1], [0, 0, 1, 1], [], []>} : vector<16x16xbf16>, vector<16x64xbf16>, vector<16x64xf32> -> vector<16x64xf32>
    %113 = arith.addf %112, %13 : vector<16x64xf32>
    %cst_70 = arith.constant 0.000000e+00 : f32
    %114 = vector.broadcast %cst_70 : f32 to vector<16x64xf32>
    %115 = arith.maximumf %113, %114 : vector<16x64xf32>
    %116 = arith.truncf %115 : vector<16x64xf32> to vector<16x64xbf16>
    %cst_71 = arith.constant dense<0.000000e+00> : vector<32x64xf32>
    %117 = tpu.matmul %2, %116, %cst_71 {dimension_numbers = #tpu.dot_dimension_numbers<[1], [0], [0], [1], [0, 0, 1, 1], [], []>} : vector<32x16xbf16>, vector<16x64xbf16>, vector<32x64xf32> -> vector<32x64xf32>
    %118 = arith.addf %117, %15 : vector<32x64xf32>
    %cst_72 = arith.constant 0.000000e+00 : f32
    %119 = vector.broadcast %cst_72 : f32 to vector<32x64xf32>
    %120 = arith.maximumf %118, %119 : vector<32x64xf32>
    %121 = arith.truncf %120 : vector<32x64xf32> to vector<32x64xbf16>
    %122 = arith.maximumf %104, %121 : vector<32x64xbf16>
    %c0_73 = arith.constant 0 : index
    %c6 = arith.constant 6 : index
    %c0_74 = arith.constant 0 : index
    %c0_75 = arith.constant 0 : index
    %123 = vector.load %arg2[%c0_73, %c6, %c0_74, %c0_75] : memref<1x8x8x64xbf16, #tpu.memory_space<vmem>>, vector<1x1x8x64xbf16>
    %124 = vector.shape_cast %123 : vector<1x1x8x64xbf16> to vector<8x64xbf16>
    %cst_76 = arith.constant dense<0.000000e+00> : vector<16x64xf32>
    %125 = tpu.matmul %0, %124, %cst_76 {dimension_numbers = #tpu.dot_dimension_numbers<[1], [0], [0], [1], [0, 0, 1, 1], [], []>} : vector<16x8xbf16>, vector<8x64xbf16>, vector<16x64xf32> -> vector<16x64xf32>
    %126 = arith.addf %125, %11 : vector<16x64xf32>
    %cst_77 = arith.constant 0.000000e+00 : f32
    %127 = vector.broadcast %cst_77 : f32 to vector<16x64xf32>
    %128 = arith.maximumf %126, %127 : vector<16x64xf32>
    %129 = arith.truncf %128 : vector<16x64xf32> to vector<16x64xbf16>
    %cst_78 = arith.constant dense<0.000000e+00> : vector<16x64xf32>
    %130 = tpu.matmul %1, %129, %cst_78 {dimension_numbers = #tpu.dot_dimension_numbers<[1], [0], [0], [1], [0, 0, 1, 1], [], []>} : vector<16x16xbf16>, vector<16x64xbf16>, vector<16x64xf32> -> vector<16x64xf32>
    %131 = arith.addf %130, %13 : vector<16x64xf32>
    %cst_79 = arith.constant 0.000000e+00 : f32
    %132 = vector.broadcast %cst_79 : f32 to vector<16x64xf32>
    %133 = arith.maximumf %131, %132 : vector<16x64xf32>
    %134 = arith.truncf %133 : vector<16x64xf32> to vector<16x64xbf16>
    %cst_80 = arith.constant dense<0.000000e+00> : vector<32x64xf32>
    %135 = tpu.matmul %2, %134, %cst_80 {dimension_numbers = #tpu.dot_dimension_numbers<[1], [0], [0], [1], [0, 0, 1, 1], [], []>} : vector<32x16xbf16>, vector<16x64xbf16>, vector<32x64xf32> -> vector<32x64xf32>
    %136 = arith.addf %135, %15 : vector<32x64xf32>
    %cst_81 = arith.constant 0.000000e+00 : f32
    %137 = vector.broadcast %cst_81 : f32 to vector<32x64xf32>
    %138 = arith.maximumf %136, %137 : vector<32x64xf32>
    %139 = arith.truncf %138 : vector<32x64xf32> to vector<32x64xbf16>
    %140 = arith.maximumf %122, %139 : vector<32x64xbf16>
    %c0_82 = arith.constant 0 : index
    %c7 = arith.constant 7 : index
    %c0_83 = arith.constant 0 : index
    %c0_84 = arith.constant 0 : index
    %141 = vector.load %arg2[%c0_82, %c7, %c0_83, %c0_84] : memref<1x8x8x64xbf16, #tpu.memory_space<vmem>>, vector<1x1x8x64xbf16>
    %142 = vector.shape_cast %141 : vector<1x1x8x64xbf16> to vector<8x64xbf16>
    %cst_85 = arith.constant dense<0.000000e+00> : vector<16x64xf32>
    %143 = tpu.matmul %0, %142, %cst_85 {dimension_numbers = #tpu.dot_dimension_numbers<[1], [0], [0], [1], [0, 0, 1, 1], [], []>} : vector<16x8xbf16>, vector<8x64xbf16>, vector<16x64xf32> -> vector<16x64xf32>
    %144 = arith.addf %143, %11 : vector<16x64xf32>
    %cst_86 = arith.constant 0.000000e+00 : f32
    %145 = vector.broadcast %cst_86 : f32 to vector<16x64xf32>
    %146 = arith.maximumf %144, %145 : vector<16x64xf32>
    %147 = arith.truncf %146 : vector<16x64xf32> to vector<16x64xbf16>
    %cst_87 = arith.constant dense<0.000000e+00> : vector<16x64xf32>
    %148 = tpu.matmul %1, %147, %cst_87 {dimension_numbers = #tpu.dot_dimension_numbers<[1], [0], [0], [1], [0, 0, 1, 1], [], []>} : vector<16x16xbf16>, vector<16x64xbf16>, vector<16x64xf32> -> vector<16x64xf32>
    %149 = arith.addf %148, %13 : vector<16x64xf32>
    %cst_88 = arith.constant 0.000000e+00 : f32
    %150 = vector.broadcast %cst_88 : f32 to vector<16x64xf32>
    %151 = arith.maximumf %149, %150 : vector<16x64xf32>
    %152 = arith.truncf %151 : vector<16x64xf32> to vector<16x64xbf16>
    %cst_89 = arith.constant dense<0.000000e+00> : vector<32x64xf32>
    %153 = tpu.matmul %2, %152, %cst_89 {dimension_numbers = #tpu.dot_dimension_numbers<[1], [0], [0], [1], [0, 0, 1, 1], [], []>} : vector<32x16xbf16>, vector<16x64xbf16>, vector<32x64xf32> -> vector<32x64xf32>
    %154 = arith.addf %153, %15 : vector<32x64xf32>
    %cst_90 = arith.constant 0.000000e+00 : f32
    %155 = vector.broadcast %cst_90 : f32 to vector<32x64xf32>
    %156 = arith.maximumf %154, %155 : vector<32x64xf32>
    %157 = arith.truncf %156 : vector<32x64xf32> to vector<32x64xbf16>
    %158 = arith.maximumf %140, %157 : vector<32x64xbf16>
    %cst_91 = arith.constant dense<0.000000e+00> : vector<32x64xf32>
    %159 = tpu.matmul %6, %158, %cst_91 {dimension_numbers = #tpu.dot_dimension_numbers<[1], [0], [0], [1], [0, 0, 1, 1], [], []>} : vector<32x32xbf16>, vector<32x64xbf16>, vector<32x64xf32> -> vector<32x64xf32>
    %160 = vector.broadcast %8 : vector<32x1xf32> to vector<32x64xf32>
    %161 = arith.addf %159, %160 : vector<32x64xf32>
    %cst_92 = arith.constant 0.000000e+00 : f32
    %162 = vector.broadcast %cst_92 : f32 to vector<32x64xf32>
    %163 = arith.maximumf %161, %162 : vector<32x64xf32>
    %164 = arith.truncf %163 : vector<32x64xf32> to vector<32x64xbf16>
    %cst_93 = arith.constant dense<0.000000e+00> : vector<32x64xf32>
    %165 = tpu.matmul %7, %164, %cst_93 {dimension_numbers = #tpu.dot_dimension_numbers<[1], [0], [0], [1], [0, 0, 1, 1], [], []>} : vector<32x32xbf16>, vector<32x64xbf16>, vector<32x64xf32> -> vector<32x64xf32>
    %166 = vector.broadcast %9 : vector<32x1xf32> to vector<32x64xf32>
    %167 = arith.addf %165, %166 : vector<32x64xf32>
    %cst_94 = arith.constant 0.000000e+00 : f32
    %168 = vector.broadcast %cst_94 : f32 to vector<32x64xf32>
    %169 = arith.maximumf %167, %168 : vector<32x64xf32>
    %c0_95 = arith.constant 0 : index
    %c0_96 = arith.constant 0 : index
    %c0_97 = arith.constant 0 : index
    %170 = vector.load %arg13[%c0_95, %c0_96, %c0_97] : memref<1x32x64xf32, #tpu.memory_space<vmem>>, vector<1x32x64xf32>
    %171 = vector.shape_cast %170 : vector<1x32x64xf32> to vector<32x64xf32>
    %172 = vector.shape_cast %169 : vector<32x64xf32> to vector<1x32x64xf32>
    tpu.vector_store %arg13[%c0_95, %c0_96, %c0_97], %172 {strides = array<i32>} : memref<1x32x64xf32, #tpu.memory_space<vmem>>, vector<1x32x64xf32>,
    return
  }
  func.func @transform_0(%arg0: i32, %arg1: i32) -> (i32, i32, i32, i32) {
    %c0_i32 = arith.constant 0 : i32
    %c0_i32_0 = arith.constant 0 : i32
    %c0_i32_1 = arith.constant 0 : i32
    return %arg0, %c0_i32, %c0_i32_0, %arg1 : i32, i32, i32, i32
  }
  func.func @transform_1(%arg0: i32, %arg1: i32) -> (i32, i32) {
    %c0_i32 = arith.constant 0 : i32
    %c0_i32_0 = arith.constant 0 : i32
    %c0_i32_1 = arith.constant 0 : i32
    return %c0_i32, %c0_i32_0 : i32, i32
  }
  func.func @transform_2(%arg0: i32, %arg1: i32) -> (i32, i32) {
    %c0_i32 = arith.constant 0 : i32
    %c0_i32_0 = arith.constant 0 : i32
    %c0_i32_1 = arith.constant 0 : i32
    return %c0_i32, %c0_i32_0 : i32, i32
  }
  func.func @transform_3(%arg0: i32, %arg1: i32) -> (i32, i32) {
    %c0_i32 = arith.constant 0 : i32
    %c0_i32_0 = arith.constant 0 : i32
    %c0_i32_1 = arith.constant 0 : i32
    return %c0_i32, %c0_i32_0 : i32, i32
  }
  func.func @transform_4(%arg0: i32, %arg1: i32) -> (i32, i32) {
    %c0_i32 = arith.constant 0 : i32
    %c0_i32_0 = arith.constant 0 : i32
    %c0_i32_1 = arith.constant 0 : i32
    return %c0_i32, %c0_i32_0 : i32, i32
  }
  func.func @transform_5(%arg0: i32, %arg1: i32) -> (i32, i32) {
    %c0_i32 = arith.constant 0 : i32
    %c0_i32_0 = arith.constant 0 : i32
    %c0_i32_1 = arith.constant 0 : i32
    return %c0_i32, %c0_i32_0 : i32, i32
  }
  func.func @transform_6(%arg0: i32, %arg1: i32) -> (i32, i32) {
    %c0_i32 = arith.constant 0 : i32
    %c0_i32_0 = arith.constant 0 : i32
    %c0_i32_1 = arith.constant 0 : i32
    return %c0_i32, %c0_i32_0 : i32, i32
  }
  func.func @transform_7(%arg0: i32, %arg1: i32) -> (i32, i32) {
    %c0_i32 = arith.constant 0 : i32
    %c0_i32_0 = arith.constant 0 : i32
    %c0_i32_1 = arith.constant 0 : i32
    return %c0_i32, %c0_i32_0 : i32, i32
  }
  func.func @transform_8(%arg0: i32, %arg1: i32) -> (i32, i32) {
    %c0_i32 = arith.constant 0 : i32
    %c0_i32_0 = arith.constant 0 : i32
    %c0_i32_1 = arith.constant 0 : i32
    return %c0_i32, %c0_i32_0 : i32, i32
  }
  func.func @transform_9(%arg0: i32, %arg1: i32) -> (i32, i32) {
    %c0_i32 = arith.constant 0 : i32
    %c0_i32_0 = arith.constant 0 : i32
    %c0_i32_1 = arith.constant 0 : i32
    return %c0_i32, %c0_i32_0 : i32, i32
  }
  func.func @transform_10(%arg0: i32, %arg1: i32) -> (i32, i32) {
    %c0_i32 = arith.constant 0 : i32
    %c0_i32_0 = arith.constant 0 : i32
    %c0_i32_1 = arith.constant 0 : i32
    return %c0_i32, %c0_i32_0 : i32, i32
  }
  func.func @transform_11(%arg0: i32, %arg1: i32) -> (i32, i32, i32) {
    %c0_i32 = arith.constant 0 : i32
    %c0_i32_0 = arith.constant 0 : i32
    return %arg0, %c0_i32, %arg1 : i32, i32, i32
  }
}

</mosaic_0001>

<llo_original>
// kernel: tpu_custom_call.1
$region0: #{tpu_custom_call.1}
  #allocation0 [shape = 'u32[]', space=smem, size = 0x4, offset = 0x4, fixed_abs, tag = 'smem constant byte address 0x4 - core index']
  #allocation1 [shape = 'u32[72,128]{1,0:T(1,128)}', space=vmem, size = 0x9000, scoped, tag = 'internal scratch']
  %s0 = inlined_call_operand.vmem [shape: bf16[2,8,8,64], index: 0, kind: input, shape index: {}]
  %s1 = inlined_call_operand.vmem [shape: bf16[16,8], index: 1, kind: input, shape index: {}]
  %s2 = inlined_call_operand.vmem [shape: f32[16,1], index: 2, kind: input, shape index: {}]
  %s3 = inlined_call_operand.vmem [shape: bf16[16,16], index: 3, kind: input, shape index: {}]
  %s4 = inlined_call_operand.vmem [shape: f32[16,1], index: 4, kind: input, shape index: {}]
  %s5 = inlined_call_operand.vmem [shape: bf16[32,16], index: 5, kind: input, shape index: {}]
  %s6 = inlined_call_operand.vmem [shape: f32[32,1], index: 6, kind: input, shape index: {}]
  %s7 = inlined_call_operand.vmem [shape: bf16[32,32], index: 7, kind: input, shape index: {}]
  %s8 = inlined_call_operand.vmem [shape: f32[32,1], index: 8, kind: input, shape index: {}]
  %s9 = inlined_call_operand.vmem [shape: bf16[32,32], index: 9, kind: input, shape index: {}]
  %s10 = inlined_call_operand.vmem [shape: f32[32,1], index: 10, kind: input, shape index: {}]
  %s11 = inlined_call_operand.hbm [shape: f32[2,32,64], index: 11, kind: output, shape index: {}]
  %s12 = sld [smem:[#allocation0]]
  $region77: #{tpu_custom_call.1} parent=0
    _
  %s14 = ssub.s32 1, %s12
  %s15 = scalar_select 0, %s14, %s12
  $region1: #{tpu_custom_call.1} parent=0
    #allocation2 [shape = 'u8[32768]{0}', space=vmem, size = 0x8000, scoped, tag = 'output window, operand 0']
    #allocation3 [shape = 's32[2]{0}', space=sflag, size = 0x8, scoped, tag = 'scoped memory for tpu_custom_call.1']
    %16 = vsyncpa [#allocation3], 0
    %s17 = scalar_lea.sflag [#allocation3], 1
    %18 = vsyncpa %s17, 0
    loop: start=0, step=1, limit=4
    $region2: #{tpu_custom_call.1} parent=1 // loop_pre_header
      _
    $region3: #{tpu_custom_call.1} parent=1 // loop_header
      %s20 = sphi 0, %s24
      %p21 = scmp.ge.s32.totalorder %s20, 4
      %s27 = sphi 0, %s39
      %s28 = sphi 0, %s35
      %s29 = sphi 0, %s27
      %s30 = sphi 0, %s28
      %s31 = sphi 0, %s29
      %s32 = sphi 0, %s30
      %s44 = sphi 0, %s46
      %s47 = sphi 0, %s44
      %s48 = sphi 0, %s47
      %s64 = sphi 0, %s48
      %s68 = sphi 0, %s68
      %s70 = sphi 0, %s68
      %s71 = sphi 0, %s70
      %s85 = sphi 0, %s71
      %s89 = sphi 0, %s89
      %s91 = sphi 0, %s89
      %s92 = sphi 0, %s91
      %s106 = sphi 0, %s92
      %s110 = sphi 0, %s110
      %s112 = sphi 0, %s110
      %s113 = sphi 0, %s112
      %s127 = sphi 0, %s113
      %s131 = sphi 0, %s131
      %s133 = sphi 0, %s131
      %s134 = sphi 0, %s133
      %s148 = sphi 0, %s134
      %s152 = sphi 0, %s152
      %s154 = sphi 0, %s152
      %s155 = sphi 0, %s154
      %s169 = sphi 0, %s155
      %s173 = sphi 0, %s173
      %s175 = sphi 0, %s173
      %s176 = sphi 0, %s175
      %s190 = sphi 0, %s176
      %s194 = sphi 0, %s194
      %s196 = sphi 0, %s194
      %s197 = sphi 0, %s196
      %s211 = sphi 0, %s197
      %s215 = sphi 0, %s215
      %s217 = sphi 0, %s215
      %s218 = sphi 0, %s217
      %s232 = sphi 0, %s218
      %s236 = sphi 0, %s236
      %s238 = sphi 0, %s236
      %s239 = sphi 0, %s238
      %s253 = sphi 0, %s239
      %s257 = sphi 0, %s257
      %s259 = sphi 0, %s257
      %s260 = sphi 0, %s259
      %s274 = sphi 0, %s260
      %s282 = sphi 0, %s284
      %s285 = sphi 0, %s282
      %s286 = sphi 0, %s285
      %s302 = sphi 0, %s286
    $region4: #{tpu_custom_call.1} parent=1 // loop_header_branch
      %23 = sbr.rel (%p21) target = $region8
    $region5: #{tpu_custom_call.1} parent=1 // loop_body
      %s25 = ssub.s32 %s20, 1
      %s26 = ssub.s32 %s20, 2
      %s33 = sadd.s32 1, %s28
      %p34 = scmp.ge.s32.totalorder %s33, 1
      %s35 = scalar_select %p34, 0, %s33
      %s36 = sadd.s32 1, %s27
      %s37 = scalar_select %p34, %s36, %s27
      %p38 = scmp.ge.s32.totalorder %s37, 2
      %s39 = scalar_select %p38, 0, %s37
      %s40 = ssub.s32 %s27, %s39
      %s41 = ssub.s32 %s28, %s35
      %s42 = sor.u32 %s40, %s41
      %p43 = scmp.eq.s32.totalorder %s42, 0
      %s45 = sadd.s32 %s44, 1
      %s46 = scalar_select %p43, %s44, %s45
      %p49 = pneg %p43
      %p50 = scmp.eq.s32.totalorder %s20, 1
      %p51 = por %p49, %p50
      %p52 = scmp.ne.s32.totalorder %s44, %s47
      %p53 = scmp.eq.s32.totalorder %s20, 0
      %p54 = por %p52, %p53
      %p55 = scmp.ne.s32.totalorder %s44, %s47
      %p56 = scmp.eq.s32.totalorder %s25, 1
      %p57 = por %p55, %p56
      %p58 = scmp.ne.s32.totalorder %s47, %s48
      %p59 = scmp.eq.s32.totalorder %s25, 0
      %p60 = por %p58, %p59
      %p61 = scmp.ne.s32.totalorder %s47, %s48
      %p62 = scmp.eq.s32.totalorder %s26, 1
      %p63 = por %p61, %p62
      %p65 = scmp.ne.s32.totalorder %s48, %s64
      %p66 = scmp.eq.s32.totalorder %s26, 0
      %p67 = por %p65, %p66
      %s69 = sadd.s32 %s68, 1
      %p72 = scmp.eq.s32.totalorder %s20, 1
      %p73 = scmp.ne.s32.totalorder %s68, %s70
      %p74 = scmp.eq.s32.totalorder %s20, 0
      %p75 = por %p73, %p74
      %p76 = scmp.ne.s32.totalorder %s68, %s70
      %p77 = scmp.eq.s32.totalorder %s25, 1
      %p78 = por %p76, %p77
      %p79 = scmp.ne.s32.totalorder %s70, %s71
      %p80 = scmp.eq.s32.totalorder %s25, 0
      %p81 = por %p79, %p80
      %p82 = scmp.ne.s32.totalorder %s70, %s71
      %p83 = scmp.eq.s32.totalorder %s26, 1
      %p84 = por %p82, %p83
      %p86 = scmp.ne.s32.totalorder %s71, %s85
      %p87 = scmp.eq.s32.totalorder %s26, 0
      %p88 = por %p86, %p87
      %s90 = sadd.s32 %s89, 1
      %p93 = scmp.eq.s32.totalorder %s20, 1
      %p94 = scmp.ne.s32.totalorder %s89, %s91
      %p95 = scmp.eq.s32.totalorder %s20, 0
      %p96 = por %p94, %p95
      %p97 = scmp.ne.s32.totalorder %s89, %s91
      %p98 = scmp.eq.s32.totalorder %s25, 1
      %p99 = por %p97, %p98
      %p100 = scmp.ne.s32.totalorder %s91, %s92
      %p101 = scmp.eq.s32.totalorder %s25, 0
      %p102 = por %p100, %p101
      %p103 = scmp.ne.s32.totalorder %s91, %s92
      %p104 = scmp.eq.s32.totalorder %s26, 1
      %p105 = por %p103, %p104
      %p107 = scmp.ne.s32.totalorder %s92, %s106
      %p108 = scmp.eq.s32.totalorder %s26, 0
      %p109 = por %p107, %p108
      %s111 = sadd.s32 %s110, 1
      %p114 = scmp.eq.s32.totalorder %s20, 1
      %p115 = scmp.ne.s32.totalorder %s110, %s112
      %p116 = scmp.eq.s32.totalorder %s20, 0
      %p117 = por %p115, %p116
      %p118 = scmp.ne.s32.totalorder %s110, %s112
      %p119 = scmp.eq.s32.totalorder %s25, 1
      %p120 = por %p118, %p119
      %p121 = scmp.ne.s32.totalorder %s112, %s113
      %p122 = scmp.eq.s32.totalorder %s25, 0
      %p123 = por %p121, %p122
      %p124 = scmp.ne.s32.totalorder %s112, %s113
      %p125 = scmp.eq.s32.totalorder %s26, 1
      %p126 = por %p124, %p125
      %p128 = scmp.ne.s32.totalorder %s113, %s127
      %p129 = scmp.eq.s32.totalorder %s26, 0
      %p130 = por %p128, %p129
      %s132 = sadd.s32 %s131, 1
      %p135 = scmp.eq.s32.totalorder %s20, 1
      %p136 = scmp.ne.s32.totalorder %s131, %s133
      %p137 = scmp.eq.s32.totalorder %s20, 0
      %p138 = por %p136, %p137
      %p139 = scmp.ne.s32.totalorder %s131, %s133
      %p140 = scmp.eq.s32.totalorder %s25, 1
      %p141 = por %p139, %p140
      %p142 = scmp.ne.s32.totalorder %s133, %s134
      %p143 = scmp.eq.s32.totalorder %s25, 0
      %p144 = por %p142, %p143
      %p145 = scmp.ne.s32.totalorder %s133, %s134
      %p146 = scmp.eq.s32.totalorder %s26, 1
      %p147 = por %p145, %p146
      %p149 = scmp.ne.s32.totalorder %s134, %s148
      %p150 = scmp.eq.s32.totalorder %s26, 0
      %p151 = por %p149, %p150
      %s153 = sadd.s32 %s152, 1
      %p156 = scmp.eq.s32.totalorder %s20, 1
      %p157 = scmp.ne.s32.totalorder %s152, %s154
      %p158 = scmp.eq.s32.totalorder %s20, 0
      %p159 = por %p157, %p158
      %p160 = scmp.ne.s32.totalorder %s152, %s154
      %p161 = scmp.eq.s32.totalorder %s25, 1
      %p162 = por %p160, %p161
      %p163 = scmp.ne.s32.totalorder %s154, %s155
      %p164 = scmp.eq.s32.totalorder %s25, 0
      %p165 = por %p163, %p164
      %p166 = scmp.ne.s32.totalorder %s154, %s155
      %p167 = scmp.eq.s32.totalorder %s26, 1
      %p168 = por %p166, %p167
      %p170 = scmp.ne.s32.totalorder %s155, %s169
      %p171 = scmp.eq.s32.totalorder %s26, 0
      %p172 = por %p170, %p171
      %s174 = sadd.s32 %s173, 1
      %p177 = scmp.eq.s32.totalorder %s20, 1
      %p178 = scmp.ne.s32.totalorder %s173, %s175
      %p179 = scmp.eq.s32.totalorder %s20, 0
      %p180 = por %p178, %p179
      %p181 = scmp.ne.s32.totalorder %s173, %s175
      %p182 = scmp.eq.s32.totalorder %s25, 1
      %p183 = por %p181, %p182
      %p184 = scmp.ne.s32.totalorder %s175, %s176
      %p185 = scmp.eq.s32.totalorder %s25, 0
      %p186 = por %p184, %p185
      %p187 = scmp.ne.s32.totalorder %s175, %s176
      %p188 = scmp.eq.s32.totalorder %s26, 1
      %p189 = por %p187, %p188
      %p191 = scmp.ne.s32.totalorder %s176, %s190
      %p192 = scmp.eq.s32.totalorder %s26, 0
      %p193 = por %p191, %p192
      %s195 = sadd.s32 %s194, 1
      %p198 = scmp.eq.s32.totalorder %s20, 1
      %p199 = scmp.ne.s32.totalorder %s194, %s196
      %p200 = scmp.eq.s32.totalorder %s20, 0
      %p201 = por %p199, %p200
      %p202 = scmp.ne.s32.totalorder %s194, %s196
      %p203 = scmp.eq.s32.totalorder %s25, 1
      %p204 = por %p202, %p203
      %p205 = scmp.ne.s32.totalorder %s196, %s197
      %p206 = scmp.eq.s32.totalorder %s25, 0
      %p207 = por %p205, %p206
      %p208 = scmp.ne.s32.totalorder %s196, %s197
      %p209 = scmp.eq.s32.totalorder %s26, 1
      %p210 = por %p208, %p209
      %p212 = scmp.ne.s32.totalorder %s197, %s211
      %p213 = scmp.eq.s32.totalorder %s26, 0
      %p214 = por %p212, %p213
      %s216 = sadd.s32 %s215, 1
      %p219 = scmp.eq.s32.totalorder %s20, 1
      %p220 = scmp.ne.s32.totalorder %s215, %s217
      %p221 = scmp.eq.s32.totalorder %s20, 0
      %p222 = por %p220, %p221
      %p223 = scmp.ne.s32.totalorder %s215, %s217
      %p224 = scmp.eq.s32.totalorder %s25, 1
      %p225 = por %p223, %p224
      %p226 = scmp.ne.s32.totalorder %s217, %s218
      %p227 = scmp.eq.s32.totalorder %s25, 0
      %p228 = por %p226, %p227
      %p229 = scmp.ne.s32.totalorder %s217, %s218
      %p230 = scmp.eq.s32.totalorder %s26, 1
      %p231 = por %p229, %p230
      %p233 = scmp.ne.s32.totalorder %s218, %s232
      %p234 = scmp.eq.s32.totalorder %s26, 0
      %p235 = por %p233, %p234
      %s237 = sadd.s32 %s236, 1
      %p240 = scmp.eq.s32.totalorder %s20, 1
      %p241 = scmp.ne.s32.totalorder %s236, %s238
      %p242 = scmp.eq.s32.totalorder %s20, 0
      %p243 = por %p241, %p242
      %p244 = scmp.ne.s32.totalorder %s236, %s238
      %p245 = scmp.eq.s32.totalorder %s25, 1
      %p246 = por %p244, %p245
      %p247 = scmp.ne.s32.totalorder %s238, %s239
      %p248 = scmp.eq.s32.totalorder %s25, 0
      %p249 = por %p247, %p248
      %p250 = scmp.ne.s32.totalorder %s238, %s239
      %p251 = scmp.eq.s32.totalorder %s26, 1
      %p252 = por %p250, %p251
      %p254 = scmp.ne.s32.totalorder %s239, %s253
      %p255 = scmp.eq.s32.totalorder %s26, 0
      %p256 = por %p254, %p255
      %s258 = sadd.s32 %s257, 1
      %p261 = scmp.eq.s32.totalorder %s20, 1
      %p262 = scmp.ne.s32.totalorder %s257, %s259
      %p263 = scmp.eq.s32.totalorder %s20, 0
      %p264 = por %p262, %p263
      %p265 = scmp.ne.s32.totalorder %s257, %s259
      %p266 = scmp.eq.s32.totalorder %s25, 1
      %p267 = por %p265, %p266
      %p268 = scmp.ne.s32.totalorder %s259, %s260
      %p269 = scmp.eq.s32.totalorder %s25, 0
      %p270 = por %p268, %p269
      %p271 = scmp.ne.s32.totalorder %s259, %s260
      %p272 = scmp.eq.s32.totalorder %s26, 1
      %p273 = por %p271, %p272
      %p275 = scmp.ne.s32.totalorder %s260, %s274
      %p276 = scmp.eq.s32.totalorder %s26, 0
      %p277 = por %p275, %p276
      %s278 = ssub.s32 %s27, %s39
      %s279 = ssub.s32 %s28, %s35
      %s280 = sor.u32 %s278, %s279
      %p281 = scmp.eq.s32.totalorder %s280, 0
      %s283 = sadd.s32 %s282, 1
      %s284 = scalar_select %p281, %s282, %s283
      %p287 = pneg %p281
      %p288 = scmp.eq.s32.totalorder %s20, 1
      %p289 = por %p287, %p288
      %p290 = scmp.ne.s32.totalorder %s282, %s285
      %p291 = scmp.eq.s32.totalorder %s20, 0
      %p292 = por %p290, %p291
      %p293 = scmp.ne.s32.totalorder %s282, %s285
      %p294 = scmp.eq.s32.totalorder %s25, 1
      %p295 = por %p293, %p294
      %p296 = scmp.ne.s32.totalorder %s285, %s286
      %p297 = scmp.eq.s32.totalorder %s25, 0
      %p298 = por %p296, %p297
      %p299 = scmp.ne.s32.totalorder %s285, %s286
      %p300 = scmp.eq.s32.totalorder %s26, 1
      %p301 = por %p299, %p300
      %p303 = scmp.ne.s32.totalorder %s286, %s302
      %p304 = scmp.eq.s32.totalorder %s26, 0
      %p305 = por %p303, %p304
      %p306 = scmp.le.s32.totalorder 1, %s20
      %p307 = scmp.lt.s32.totalorder %s20, 3
      %p308 = pnand %p306, %p307
      %p309 = pneg %p308
      // Predicated region
      $region9: #{tpu_custom_call.1} parent=5 // pred_check
        _
      $region10: #{tpu_custom_call.1} parent=5 // pred_check_branch
        %311 = sbr.rel (%p308) target = $region12
      $region11: #{tpu_custom_call.1} parent=5 // pred_region
        %s312 = ssub.s32 %s20, 1
        // Predicated region
        $region13: #{tpu_custom_call.1} parent=11 // pred_check
          %p313 = pneg %p81
        $region14: #{tpu_custom_call.1} parent=11 // pred_check_branch
          %315 = sbr.rel (%p313) target = $region16
        $region15: #{tpu_custom_call.1} parent=11 // pred_region
          _
        $region16: #{tpu_custom_call.1} parent=11 // pred_fallthru
          _
        // Predicated region
        $region17: #{tpu_custom_call.1} parent=11 // pred_check
          %p316 = pneg %p102
        $region18: #{tpu_custom_call.1} parent=11 // pred_check_branch
          %318 = sbr.rel (%p316) target = $region20
        $region19: #{tpu_custom_call.1} parent=11 // pred_region
          _
        $region20: #{tpu_custom_call.1} parent=11 // pred_fallthru
          _
        // Predicated region
        $region21: #{tpu_custom_call.1} parent=11 // pred_check
          %p319 = pneg %p123
        $region22: #{tpu_custom_call.1} parent=11 // pred_check_branch
          %321 = sbr.rel (%p319) target = $region24
        $region23: #{tpu_custom_call.1} parent=11 // pred_region
          _
        $region24: #{tpu_custom_call.1} parent=11 // pred_fallthru
          _
        // Predicated region
        $region25: #{tpu_custom_call.1} parent=11 // pred_check
          %p322 = pneg %p144
        $region26: #{tpu_custom_call.1} parent=11 // pred_check_branch
          %324 = sbr.rel (%p322) target = $region28
        $region27: #{tpu_custom_call.1} parent=11 // pred_region
          _
        $region28: #{tpu_custom_call.1} parent=11 // pred_fallthru
          _
        // Predicated region
        $region29: #{tpu_custom_call.1} parent=11 // pred_check
          %p325 = pneg %p165
        $region30: #{tpu_custom_call.1} parent=11 // pred_check_branch
          %327 = sbr.rel (%p325) target = $region32
        $region31: #{tpu_custom_call.1} parent=11 // pred_region
          _
        $region32: #{tpu_custom_call.1} parent=11 // pred_fallthru
          _
        // Predicated region
        $region33: #{tpu_custom_call.1} parent=11 // pred_check
          %p328 = pneg %p186
        $region34: #{tpu_custom_call.1} parent=11 // pred_check_branch
          %330 = sbr.rel (%p328) target = $region36
        $region35: #{tpu_custom_call.1} parent=11 // pred_region
          _
        $region36: #{tpu_custom_call.1} parent=11 // pred_fallthru
          _
        // Predicated region
        $region37: #{tpu_custom_call.1} parent=11 // pred_check
          %p331 = pneg %p207
        $region38: #{tpu_custom_call.1} parent=11 // pred_check_branch
          %333 = sbr.rel (%p331) target = $region40
        $region39: #{tpu_custom_call.1} parent=11 // pred_region
          _
        $region40: #{tpu_custom_call.1} parent=11 // pred_fallthru
          _
        // Predicated region
        $region41: #{tpu_custom_call.1} parent=11 // pred_check
          %p334 = pneg %p228
        $region42: #{tpu_custom_call.1} parent=11 // pred_check_branch
          %336 = sbr.rel (%p334) target = $region44
        $region43: #{tpu_custom_call.1} parent=11 // pred_region
          _
        $region44: #{tpu_custom_call.1} parent=11 // pred_fallthru
          _
        // Predicated region
        $region45: #{tpu_custom_call.1} parent=11 // pred_check
          %p337 = pneg %p249
        $region46: #{tpu_custom_call.1} parent=11 // pred_check_branch
          %339 = sbr.rel (%p337) target = $region48
        $region47: #{tpu_custom_call.1} parent=11 // pred_region
          _
        $region48: #{tpu_custom_call.1} parent=11 // pred_fallthru
          _
        // Predicated region
        $region49: #{tpu_custom_call.1} parent=11 // pred_check
          %p340 = pneg %p270
        $region50: #{tpu_custom_call.1} parent=11 // pred_check_branch
          %342 = sbr.rel (%p340) target = $region52
        $region51: #{tpu_custom_call.1} parent=11 // pred_region
          _
        $region52: #{tpu_custom_call.1} parent=11 // pred_fallthru
          _
      $region12: #{tpu_custom_call.1} parent=5 // pred_fallthru
        _
      %p343 = scmp.lt.s32.totalorder %s20, 2
      // Predicated region
      $region53: #{tpu_custom_call.1} parent=5 // pred_check
        %p344 = pneg %p343
      $region54: #{tpu_custom_call.1} parent=5 // pred_check_branch
        %346 = sbr.rel (%p344) target = $region56
      $region55: #{tpu_custom_call.1} parent=5 // pred_region
        // Predicated region
        $region57: #{tpu_custom_call.1} parent=55 // pred_check
          %p347 = pneg %p54
        $region58: #{tpu_custom_call.1} parent=55 // pred_check_branch
          %349 = sbr.rel (%p347) target = $region60
        $region59: #{tpu_custom_call.1} parent=55 // pred_region
          %p350 = scmp.lt.s32.totalorder %s27, 1
          %s351 = scalar_select %p350, %s27, 1
          %p352 = scmp.lt.s32.totalorder %s28, 0
          %s353 = scalar_select %p352, %s28, 0
          %s354 = smul.addr %s351, 8
          %s355 = sadd.s32 %s353, %s354
          %s356 = smul.addr %s355, 4
          %s357 = scalar_lea.vmem %s0, %s356
        $region60: #{tpu_custom_call.1} parent=55 // pred_fallthru
          _
      $region56: #{tpu_custom_call.1} parent=5 // pred_fallthru
        _
      %p358 = scmp.le.s32.totalorder 1, %s20
      %p359 = scmp.lt.s32.totalorder %s20, 3
      %p360 = pnand %p358, %p359
      %p361 = pneg %p360
      // Predicated region
      $region61: #{tpu_custom_call.1} parent=5 // pred_check
        _
      $region62: #{tpu_custom_call.1} parent=5 // pred_check_branch
        %363 = sbr.rel (%p360) target = $region64
      $region63: #{tpu_custom_call.1} parent=5 // pred_region
        %s364 = ssub.s32 %s20, 1
        %p365 = scmp.lt.s32.totalorder %s29, 1
        %s366 = scalar_select %p365, %s29, 1
        %p367 = scmp.lt.s32.totalorder %s30, 0
        %s368 = scalar_select %p367, %s30, 0
        %s369 = smul.addr %s366, 8
        %s370 = sadd.s32 %s368, %s369
        %s371 = smul.addr %s370, 4
        %s372 = scalar_lea.vmem %s0, %s371
        %p373 = pneg %p60
        %p374 = pneg %p57
        %p375 = pneg %p81
        %p376 = pneg %p78
        %p377 = pneg %p102
        %p378 = pneg %p99
        %p379 = pneg %p123
        %p380 = pneg %p120
        %p381 = pneg %p144
        %p382 = pneg %p141
        %p383 = pneg %p165
        %p384 = pneg %p162
        %p385 = pneg %p186
        %p386 = pneg %p183
        %p387 = pneg %p207
        %p388 = pneg %p204
        %p389 = pneg %p228
        %p390 = pneg %p225
        %p391 = pneg %p249
        %p392 = pneg %p246
        %p393 = pneg %p270
        %p394 = pneg %p267
        %p395 = pneg %p298
        %p396 = pneg %p295
        %s397 = sand.u32 %s285, 1
        %s398 = scalar_lea.sflag [#allocation3], %s397
        %s399 = sand.u32 %s285, 1
        %s400 = smul.addr %s399, 32
        %s401 = scalar_lea.vmem [#allocation2], %s400
        %p402 = scmp.lt.s32.totalorder %s29, 1
        %s403 = scalar_select %p402, %s29, 1
        %p404 = scmp.lt.s32.totalorder %s30, 0
        %s405 = scalar_select %p404, %s30, 0
        %s406 = smul.addr %s403, 8
        %s407 = sadd.s32 %s405, %s406
        %s408 = smul.addr %s407, 4
        %s409 = scalar_lea.vmem %s0, %s408
        %v411 = vld [vmem:[%s1] sm:$0xf]
        %v412 = vld [vmem:[%s1 + $0x4] sm:$0xf]
        %v413 = vld [vmem:[%s3] sm:$0xf]
        %v414 = vld [vmem:[%s3 + $0x4] sm:$0xf]
        %v415 = vld [vmem:[%s5] sm:$0xf]
        %v416 = vld [vmem:[%s5 + $0x4] sm:$0xf]
        %v417 = vld [vmem:[%s5 + $0x8] sm:$0xf]
        %v418 = vld [vmem:[%s5 + $0xc] sm:$0xf]
        %v419 = vld [vmem:[%s2] sm:$0xff]
        %v420 = vld [vmem:[%s2 + $0x8] sm:$0xff]
        %v421 = vld [vmem:[%s4] sm:$0xff]
        %v422 = vld [vmem:[%s4 + $0x8] sm:$0xff]
        %v423 = vld [vmem:[%s6] sm:$0xff]
        %v424 = vld [vmem:[%s6 + $0x8] sm:$0xff]
        %v425 = vld [vmem:[%s6 + $0x10] sm:$0xff]
        %v426 = vld [vmem:[%s6 + $0x18] sm:$0xff]
        %v427 = vld [vmem:[%s7] sm:$0xf]
        %v428 = vld [vmem:[%s7 + $0x4] sm:$0xf]
        %v429 = vld [vmem:[%s7 + $0x8] sm:$0xf]
        %v430 = vld [vmem:[%s7 + $0xc] sm:$0xf]
        %v431 = vld [vmem:[%s9] sm:$0xf]
        %v432 = vld [vmem:[%s9 + $0x4] sm:$0xf]
        %v433 = vld [vmem:[%s9 + $0x8] sm:$0xf]
        %v434 = vld [vmem:[%s9 + $0xc] sm:$0xf]
        %v435 = vld [vmem:[%s8] sm:$0xff]
        %v436 = vld [vmem:[%s8 + $0x8] sm:$0xff]
        %v437 = vld [vmem:[%s8 + $0x10] sm:$0xff]
        %v438 = vld [vmem:[%s8 + $0x18] sm:$0xff]
        %v439 = vld [vmem:[%s10] sm:$0xff]
        %v440 = vld [vmem:[%s10 + $0x8] sm:$0xff]
        %v441 = vld [vmem:[%s10 + $0x10] sm:$0xff]
        %v442 = vld [vmem:[%s10 + $0x18] sm:$0xff]
        %444 = vset.pattern.permute.xlu0 0
        %445 = vperm.xlu0 %444, %v419
        %v446 = vpop.permute.xlu0 %445
        %449 = vset.pattern.permute.xlu0 0
        %450 = vperm.xlu0 %449, %v420
        %v451 = vpop.permute.xlu0 %450
        %454 = vset.pattern.permute.xlu0 0
        %455 = vperm.xlu0 %454, %v421
        %v456 = vpop.permute.xlu0 %455
        %459 = vset.pattern.permute.xlu0 0
        %460 = vperm.xlu0 %459, %v422
        %v461 = vpop.permute.xlu0 %460
        %464 = vset.pattern.permute.xlu0 0
        %465 = vperm.xlu0 %464, %v423
        %v466 = vpop.permute.xlu0 %465
        %469 = vset.pattern.permute.xlu0 0
        %470 = vperm.xlu0 %469, %v424
        %v471 = vpop.permute.xlu0 %470
        %474 = vset.pattern.permute.xlu0 0
        %475 = vperm.xlu0 %474, %v425
        %v476 = vpop.permute.xlu0 %475
        %479 = vset.pattern.permute.xlu0 0
        %480 = vperm.xlu0 %479, %v426
        %v481 = vpop.permute.xlu0 %480
        %v483 = vld [vmem:[%s409] sm:$0xf]
        %v486 = vunpack.c.l.b16 %v411
        %v487 = vunpack.c.l.b16 %v412
        %v488 = vpack.c.b16 %v487, %v486
        %vm489 = vcmask 64512
        %v491 = vsel %vm489, %v488, 0
        %vm493 = vcmask 1043456
        %v495 = vsel %vm493, %v483, 0
        %497 = vmatpush.bf16.msra.mxu0 0
        %498 = vmatpush.bf16.msra.mxu0 0
        %499 = vmatpush.bf16.msra.mxu0 0
        %500 = vmatpush.bf16.msra.mxu0 0
        %501 = vmatpush.bf16.msra.mxu0 0
        %502 = vmatpush.bf16.msra.mxu0 0
        %503 = vmatpush.bf16.msra.mxu0 0
        %504 = vmatpush.bf16.msra.mxu0 %v495
        %505 = vmatmul.bf16.gmra.mxu0 %v491
        %v506 = vpop.f32.mrf.mxu0
        %v507 = vadd.f32 %v446, %v506
        %v508 = vpop.f32.mrf.mxu0
        %v509 = vadd.f32 %v451, %v508
        %510 = vdwg.mxu0
        %v511 = vmax.f32 %v507, 0.0
        %v512 = vmax.f32 %v509, 0.0
        %v513 = vpack.c.bf16 %v512, %v511
        %v516 = vunpack.c.l.b16 %v413
        %v517 = vunpack.c.l.b16 %v414
        %v518 = vpack.c.b16 %v517, %v516
        %vm519 = vcmask 130048
        %v521 = vsel %vm519, %v518, 0
        %523 = vmatpush.bf16.msra.mxu0 0
        %524 = vmatpush.bf16.msra.mxu0 0
        %525 = vmatpush.bf16.msra.mxu0 0
        %526 = vmatpush.bf16.msra.mxu0 0
        %527 = vmatpush.bf16.msra.mxu0 0
        %528 = vmatpush.bf16.msra.mxu0 0
        %529 = vmatpush.bf16.msra.mxu0 0
        %530 = vmatpush.bf16.msra.mxu0 %v513
        %531 = vmatmul.bf16.gmra.mxu0 %v521
        %v532 = vpop.f32.mrf.mxu0
        %v533 = vadd.f32 %v456, %v532
        %v534 = vpop.f32.mrf.mxu0
        %v535 = vadd.f32 %v461, %v534
        %536 = vdwg.mxu0
        %v537 = vmax.f32 %v533, 0.0
        %v538 = vmax.f32 %v535, 0.0
        %v539 = vpack.c.bf16 %v538, %v537
        %v544 = vunpack.c.l.b16 %v415
        %v545 = vunpack.c.l.b16 %v416
        %v546 = vunpack.c.l.b16 %v417
        %v547 = vunpack.c.l.b16 %v418
        %v548 = vpack.c.b16 %v545, %v544
        %v549 = vpack.c.b16 %v547, %v546
        %v551 = vsel %vm519, %v548, 0
        %v554 = vsel %vm519, %v549, 0
        %556 = vmatpush.bf16.msra.mxu0 0
        %557 = vmatpush.bf16.msra.mxu0 0
        %558 = vmatpush.bf16.msra.mxu0 0
        %559 = vmatpush.bf16.msra.mxu0 0
        %560 = vmatpush.bf16.msra.mxu0 0
        %561 = vmatpush.bf16.msra.mxu0 0
        %562 = vmatpush.bf16.msra.mxu0 0
        %563 = vmatpush.bf16.msra.mxu0 %v539
        %564 = vmatmul.bf16.gmra.mxu0 %v551
        %v565 = vpop.f32.mrf.mxu0
        %v566 = vadd.f32 %v466, %v565
        %v567 = vpop.f32.mrf.mxu0
        %v568 = vadd.f32 %v471, %v567
        %569 = vmatmul.bf16.gmra.mxu0 %v554
        %v570 = vpop.f32.mrf.mxu0
        %v571 = vadd.f32 %v476, %v570
        %v572 = vpop.f32.mrf.mxu0
        %v573 = vadd.f32 %v481, %v572
        %574 = vdwg.mxu0
        %v575 = vmax.f32 %v566, 0.0
        %v576 = vmax.f32 %v568, 0.0
        %v577 = vmax.f32 %v571, 0.0
        %v578 = vmax.f32 %v573, 0.0
        %v579 = vpack.c.bf16 %v575, %v575
        %v580 = vpack.c.bf16 %v576, %v576
        %v581 = vpack.c.bf16 %v577, %v577
        %v582 = vpack.c.bf16 %v578, %v578
        %s583 = scalar_lea.vmem %s409, 4
        %v584 = vld [vmem:[%s583] sm:$0xf]
        %v586 = vsel %vm493, %v584, 0
        %588 = vmatpush.bf16.msra.mxu0 0
        %589 = vmatpush.bf16.msra.mxu0 0
        %590 = vmatpush.bf16.msra.mxu0 0
        %591 = vmatpush.bf16.msra.mxu0 0
        %592 = vmatpush.bf16.msra.mxu0 0
        %593 = vmatpush.bf16.msra.mxu0 0
        %594 = vmatpush.bf16.msra.mxu0 0
        %595 = vmatpush.bf16.msra.mxu0 %v586
        %596 = vmatmul.bf16.gmra.mxu0 %v491
        %v597 = vpop.f32.mrf.mxu0
        %v598 = vadd.f32 %v446, %v597
        %v599 = vpop.f32.mrf.mxu0
        %v600 = vadd.f32 %v451, %v599
        %601 = vdwg.mxu0
        %v602 = vmax.f32 %v598, 0.0
        %v603 = vmax.f32 %v600, 0.0
        %v604 = vpack.c.bf16 %v603, %v602
        %605 = vmatpush.bf16.msra.mxu0 0
        %606 = vmatpush.bf16.msra.mxu0 0
        %607 = vmatpush.bf16.msra.mxu0 0
        %608 = vmatpush.bf16.msra.mxu0 0
        %609 = vmatpush.bf16.msra.mxu0 0
        %610 = vmatpush.bf16.msra.mxu0 0
        %611 = vmatpush.bf16.msra.mxu0 0
        %612 = vmatpush.bf16.msra.mxu0 %v604
        %613 = vmatmul.bf16.gmra.mxu0 %v521
        %v614 = vpop.f32.mrf.mxu0
        %v615 = vadd.f32 %v456, %v614
        %v616 = vpop.f32.mrf.mxu0
        %v617 = vadd.f32 %v461, %v616
        %618 = vdwg.mxu0
        %v619 = vmax.f32 %v615, 0.0
        %v620 = vmax.f32 %v617, 0.0
        %v621 = vpack.c.bf16 %v620, %v619
        %622 = vmatpush.bf16.msra.mxu0 0
        %623 = vmatpush.bf16.msra.mxu0 0
        %624 = vmatpush.bf16.msra.mxu0 0
        %625 = vmatpush.bf16.msra.mxu0 0
        %626 = vmatpush.bf16.msra.mxu0 0
        %627 = vmatpush.bf16.msra.mxu0 0
        %628 = vmatpush.bf16.msra.mxu0 0
        %629 = vmatpush.bf16.msra.mxu0 %v621
        %630 = vmatmul.bf16.gmra.mxu0 %v551
        %v631 = vpop.f32.mrf.mxu0
        %v632 = vadd.f32 %v466, %v631
        %v633 = vpop.f32.mrf.mxu0
        %v634 = vadd.f32 %v471, %v633
        %635 = vmatmul.bf16.gmra.mxu0 %v554
        %v636 = vpop.f32.mrf.mxu0
        %v637 = vadd.f32 %v476, %v636
        %v638 = vpop.f32.mrf.mxu0
        %v639 = vadd.f32 %v481, %v638
        %640 = vdwg.mxu0
        %v641 = vmax.f32 %v632, 0.0
        %v642 = vmax.f32 %v634, 0.0
        %v643 = vmax.f32 %v637, 0.0
        %v644 = vmax.f32 %v639, 0.0
        %v645 = vpack.c.bf16 %v641, %v641
        %v646 = vpack.c.bf16 %v642, %v642
        %v647 = vpack.c.bf16 %v643, %v643
        %v648 = vpack.c.bf16 %v644, %v644
        %v649 = vunpack.c.l.bf16 %v579
        %v650 = vunpack.c.l.bf16 %v580
        %v651 = vunpack.c.l.bf16 %v581
        %v652 = vunpack.c.l.bf16 %v582
        %v653 = vunpack.c.l.bf16 %v645
        %v654 = vunpack.c.l.bf16 %v646
        %v655 = vunpack.c.l.bf16 %v647
        %v656 = vunpack.c.l.bf16 %v648
        %v657 = vmax.f32 %v649, %v653
        %v658 = vmax.f32 %v650, %v654
        %v659 = vmax.f32 %v651, %v655
        %v660 = vmax.f32 %v652, %v656
        %v661 = vpack.c.bf16 %v657, %v657
        %v662 = vpack.c.bf16 %v658, %v658
        %v663 = vpack.c.bf16 %v659, %v659
        %v664 = vpack.c.bf16 %v660, %v660
        %s665 = scalar_lea.vmem %s409, 8
        %v666 = vld [vmem:[%s665] sm:$0xf]
        %v668 = vsel %vm493, %v666, 0
        %670 = vmatpush.bf16.msra.mxu0 0
        %671 = vmatpush.bf16.msra.mxu0 0
        %672 = vmatpush.bf16.msra.mxu0 0
        %673 = vmatpush.bf16.msra.mxu0 0
        %674 = vmatpush.bf16.msra.mxu0 0
        %675 = vmatpush.bf16.msra.mxu0 0
        %676 = vmatpush.bf16.msra.mxu0 0
        %677 = vmatpush.bf16.msra.mxu0 %v668
        %678 = vmatmul.bf16.gmra.mxu0 %v491
        %v679 = vpop.f32.mrf.mxu0
        %v680 = vadd.f32 %v446, %v679
        %v681 = vpop.f32.mrf.mxu0
        %v682 = vadd.f32 %v451, %v681
        %683 = vdwg.mxu0
        %v684 = vmax.f32 %v680, 0.0
        %v685 = vmax.f32 %v682, 0.0
        %v686 = vpack.c.bf16 %v685, %v684
        %687 = vmatpush.bf16.msra.mxu0 0
        %688 = vmatpush.bf16.msra.mxu0 0
        %689 = vmatpush.bf16.msra.mxu0 0
        %690 = vmatpush.bf16.msra.mxu0 0
        %691 = vmatpush.bf16.msra.mxu0 0
        %692 = vmatpush.bf16.msra.mxu0 0
        %693 = vmatpush.bf16.msra.mxu0 0
        %694 = vmatpush.bf16.msra.mxu0 %v686
        %695 = vmatmul.bf16.gmra.mxu0 %v521
        %v696 = vpop.f32.mrf.mxu0
        %v697 = vadd.f32 %v456, %v696
        %v698 = vpop.f32.mrf.mxu0
        %v699 = vadd.f32 %v461, %v698
        %700 = vdwg.mxu0
        %v701 = vmax.f32 %v697, 0.0
        %v702 = vmax.f32 %v699, 0.0
        %v703 = vpack.c.bf16 %v702, %v701
        %704 = vmatpush.bf16.msra.mxu0 0
        %705 = vmatpush.bf16.msra.mxu0 0
        %706 = vmatpush.bf16.msra.mxu0 0
        %707 = vmatpush.bf16.msra.mxu0 0
        %708 = vmatpush.bf16.msra.mxu0 0
        %709 = vmatpush.bf16.msra.mxu0 0
        %710 = vmatpush.bf16.msra.mxu0 0
        %711 = vmatpush.bf16.msra.mxu0 %v703
        %712 = vmatmul.bf16.gmra.mxu0 %v551
        %v713 = vpop.f32.mrf.mxu0
        %v714 = vadd.f32 %v466, %v713
        %v715 = vpop.f32.mrf.mxu0
        %v716 = vadd.f32 %v471, %v715
        %717 = vmatmul.bf16.gmra.mxu0 %v554
        %v718 = vpop.f32.mrf.mxu0
        %v719 = vadd.f32 %v476, %v718
        %v720 = vpop.f32.mrf.mxu0
        %v721 = vadd.f32 %v481, %v720
        %722 = vdwg.mxu0
        %v723 = vmax.f32 %v714, 0.0
        %v724 = vmax.f32 %v716, 0.0
        %v725 = vmax.f32 %v719, 0.0
        %v726 = vmax.f32 %v721, 0.0
        %v727 = vpack.c.bf16 %v723, %v723
        %v728 = vpack.c.bf16 %v724, %v724
        %v729 = vpack.c.bf16 %v725, %v725
        %v730 = vpack.c.bf16 %v726, %v726
        %v731 = vunpack.c.l.bf16 %v661
        %v732 = vunpack.c.l.bf16 %v662
        %v733 = vunpack.c.l.bf16 %v663
        %v734 = vunpack.c.l.bf16 %v664
        %v735 = vunpack.c.l.bf16 %v727
        %v736 = vunpack.c.l.bf16 %v728
        %v737 = vunpack.c.l.bf16 %v729
        %v738 = vunpack.c.l.bf16 %v730
        %v739 = vmax.f32 %v731, %v735
        %v740 = vmax.f32 %v732, %v736
        %v741 = vmax.f32 %v733, %v737
        %v742 = vmax.f32 %v734, %v738
        %v743 = vpack.c.bf16 %v739, %v739
        %v744 = vpack.c.bf16 %v740, %v740
        %v745 = vpack.c.bf16 %v741, %v741
        %v746 = vpack.c.bf16 %v742, %v742
        %s747 = scalar_lea.vmem %s409, 12
        %v748 = vld [vmem:[%s747] sm:$0xf]
        %v750 = vsel %vm493, %v748, 0
        %752 = vmatpush.bf16.msra.mxu0 0
        %753 = vmatpush.bf16.msra.mxu0 0
        %754 = vmatpush.bf16.msra.mxu0 0
        %755 = vmatpush.bf16.msra.mxu0 0
        %756 = vmatpush.bf16.msra.mxu0 0
        %757 = vmatpush.bf16.msra.mxu0 0
        %758 = vmatpush.bf16.msra.mxu0 0
        %759 = vmatpush.bf16.msra.mxu0 %v750
        %760 = vmatmul.bf16.gmra.mxu0 %v491
        %v761 = vpop.f32.mrf.mxu0
        %v762 = vadd.f32 %v446, %v761
        %v763 = vpop.f32.mrf.mxu0
        %v764 = vadd.f32 %v451, %v763
        %765 = vdwg.mxu0
        %v766 = vmax.f32 %v762, 0.0
        %v767 = vmax.f32 %v764, 0.0
        %v768 = vpack.c.bf16 %v767, %v766
        %769 = vmatpush.bf16.msra.mxu0 0
        %770 = vmatpush.bf16.msra.mxu0 0
        %771 = vmatpush.bf16.msra.mxu0 0
        %772 = vmatpush.bf16.msra.mxu0 0
        %773 = vmatpush.bf16.msra.mxu0 0
        %774 = vmatpush.bf16.msra.mxu0 0
        %775 = vmatpush.bf16.msra.mxu0 0
        %776 = vmatpush.bf16.msra.mxu0 %v768
        %777 = vmatmul.bf16.gmra.mxu0 %v521
        %v778 = vpop.f32.mrf.mxu0
        %v779 = vadd.f32 %v456, %v778
        %v780 = vpop.f32.mrf.mxu0
        %v781 = vadd.f32 %v461, %v780
        %782 = vdwg.mxu0
        %v783 = vmax.f32 %v779, 0.0
        %v784 = vmax.f32 %v781, 0.0
        %v785 = vpack.c.bf16 %v784, %v783
        %786 = vmatpush.bf16.msra.mxu0 0
        %787 = vmatpush.bf16.msra.mxu0 0
        %788 = vmatpush.bf16.msra.mxu0 0
        %789 = vmatpush.bf16.msra.mxu0 0
        %790 = vmatpush.bf16.msra.mxu0 0
        %791 = vmatpush.bf16.msra.mxu0 0
        %792 = vmatpush.bf16.msra.mxu0 0
        %793 = vmatpush.bf16.msra.mxu0 %v785
        %794 = vmatmul.bf16.gmra.mxu0 %v551
        %v795 = vpop.f32.mrf.mxu0
        %v796 = vadd.f32 %v466, %v795
        %v797 = vpop.f32.mrf.mxu0
        %v798 = vadd.f32 %v471, %v797
        %799 = vmatmul.bf16.gmra.mxu0 %v554
        %v800 = vpop.f32.mrf.mxu0
        %v801 = vadd.f32 %v476, %v800
        %v802 = vpop.f32.mrf.mxu0
        %v803 = vadd.f32 %v481, %v802
        %804 = vdwg.mxu0
        %v805 = vmax.f32 %v796, 0.0
        %v806 = vmax.f32 %v798, 0.0
        %v807 = vmax.f32 %v801, 0.0
        %v808 = vmax.f32 %v803, 0.0
        %v809 = vpack.c.bf16 %v805, %v805
        %v810 = vpack.c.bf16 %v806, %v806
        %v811 = vpack.c.bf16 %v807, %v807
        %v812 = vpack.c.bf16 %v808, %v808
        %v813 = vunpack.c.l.bf16 %v743
        %v814 = vunpack.c.l.bf16 %v744
        %v815 = vunpack.c.l.bf16 %v745
        %v816 = vunpack.c.l.bf16 %v746
        %v817 = vunpack.c.l.bf16 %v809
        %v818 = vunpack.c.l.bf16 %v810
        %v819 = vunpack.c.l.bf16 %v811
        %v820 = vunpack.c.l.bf16 %v812
        %v821 = vmax.f32 %v813, %v817
        %v822 = vmax.f32 %v814, %v818
        %v823 = vmax.f32 %v815, %v819
        %v824 = vmax.f32 %v816, %v820
        %v825 = vpack.c.bf16 %v821, %v821
        %v826 = vpack.c.bf16 %v822, %v822
        %v827 = vpack.c.bf16 %v823, %v823
        %v828 = vpack.c.bf16 %v824, %v824
        %s829 = scalar_lea.vmem %s409, 16
        %v830 = vld [vmem:[%s829] sm:$0xf]
        %v832 = vsel %vm493, %v830, 0
        %834 = vmatpush.bf16.msra.mxu0 0
        %835 = vmatpush.bf16.msra.mxu0 0
        %836 = vmatpush.bf16.msra.mxu0 0
        %837 = vmatpush.bf16.msra.mxu0 0
        %838 = vmatpush.bf16.msra.mxu0 0
        %839 = vmatpush.bf16.msra.mxu0 0
        %840 = vmatpush.bf16.msra.mxu0 0
        %841 = vmatpush.bf16.msra.mxu0 %v832
        %842 = vmatmul.bf16.gmra.mxu0 %v491
        %v843 = vpop.f32.mrf.mxu0
        %v844 = vadd.f32 %v446, %v843
        %v845 = vpop.f32.mrf.mxu0
        %v846 = vadd.f32 %v451, %v845
        %847 = vdwg.mxu0
        %v848 = vmax.f32 %v844, 0.0
        %v849 = vmax.f32 %v846, 0.0
        %v850 = vpack.c.bf16 %v849, %v848
        %851 = vmatpush.bf16.msra.mxu0 0
        %852 = vmatpush.bf16.msra.mxu0 0
        %853 = vmatpush.bf16.msra.mxu0 0
        %854 = vmatpush.bf16.msra.mxu0 0
        %855 = vmatpush.bf16.msra.mxu0 0
        %856 = vmatpush.bf16.msra.mxu0 0
        %857 = vmatpush.bf16.msra.mxu0 0
        %858 = vmatpush.bf16.msra.mxu0 %v850
        %859 = vmatmul.bf16.gmra.mxu0 %v521
        %v860 = vpop.f32.mrf.mxu0
        %v861 = vadd.f32 %v456, %v860
        %v862 = vpop.f32.mrf.mxu0
        %v863 = vadd.f32 %v461, %v862
        %864 = vdwg.mxu0
        %v865 = vmax.f32 %v861, 0.0
        %v866 = vmax.f32 %v863, 0.0
        %v867 = vpack.c.bf16 %v866, %v865
        %868 = vmatpush.bf16.msra.mxu0 0
        %869 = vmatpush.bf16.msra.mxu0 0
        %870 = vmatpush.bf16.msra.mxu0 0
        %871 = vmatpush.bf16.msra.mxu0 0
        %872 = vmatpush.bf16.msra.mxu0 0
        %873 = vmatpush.bf16.msra.mxu0 0
        %874 = vmatpush.bf16.msra.mxu0 0
        %875 = vmatpush.bf16.msra.mxu0 %v867
        %876 = vmatmul.bf16.gmra.mxu0 %v551
        %v877 = vpop.f32.mrf.mxu0
        %v878 = vadd.f32 %v466, %v877
        %v879 = vpop.f32.mrf.mxu0
        %v880 = vadd.f32 %v471, %v879
        %881 = vmatmul.bf16.gmra.mxu0 %v554
        %v882 = vpop.f32.mrf.mxu0
        %v883 = vadd.f32 %v476, %v882
        %v884 = vpop.f32.mrf.mxu0
        %v885 = vadd.f32 %v481, %v884
        %886 = vdwg.mxu0
        %v887 = vmax.f32 %v878, 0.0
        %v888 = vmax.f32 %v880, 0.0
        %v889 = vmax.f32 %v883, 0.0
        %v890 = vmax.f32 %v885, 0.0
        %v891 = vpack.c.bf16 %v887, %v887
        %v892 = vpack.c.bf16 %v888, %v888
        %v893 = vpack.c.bf16 %v889, %v889
        %v894 = vpack.c.bf16 %v890, %v890
        %v895 = vunpack.c.l.bf16 %v825
        %v896 = vunpack.c.l.bf16 %v826
        %v897 = vunpack.c.l.bf16 %v827
        %v898 = vunpack.c.l.bf16 %v828
        %v899 = vunpack.c.l.bf16 %v891
        %v900 = vunpack.c.l.bf16 %v892
        %v901 = vunpack.c.l.bf16 %v893
        %v902 = vunpack.c.l.bf16 %v894
        %v903 = vmax.f32 %v895, %v899
        %v904 = vmax.f32 %v896, %v900
        %v905 = vmax.f32 %v897, %v901
        %v906 = vmax.f32 %v898, %v902
        %v907 = vpack.c.bf16 %v903, %v903
        %v908 = vpack.c.bf16 %v904, %v904
        %v909 = vpack.c.bf16 %v905, %v905
        %v910 = vpack.c.bf16 %v906, %v906
        %s911 = scalar_lea.vmem %s409, 20
        %v912 = vld [vmem:[%s911] sm:$0xf]
        %v914 = vsel %vm493, %v912, 0
        %916 = vmatpush.bf16.msra.mxu0 0
        %917 = vmatpush.bf16.msra.mxu0 0
        %918 = vmatpush.bf16.msra.mxu0 0
        %919 = vmatpush.bf16.msra.mxu0 0
        %920 = vmatpush.bf16.msra.mxu0 0
        %921 = vmatpush.bf16.msra.mxu0 0
        %922 = vmatpush.bf16.msra.mxu0 0
        %923 = vmatpush.bf16.msra.mxu0 %v914
        %924 = vmatmul.bf16.gmra.mxu0 %v491
        %v925 = vpop.f32.mrf.mxu0
        %v926 = vadd.f32 %v446, %v925
        %v927 = vpop.f32.mrf.mxu0
        %v928 = vadd.f32 %v451, %v927
        %929 = vdwg.mxu0
        %v930 = vmax.f32 %v926, 0.0
        %v931 = vmax.f32 %v928, 0.0
        %v932 = vpack.c.bf16 %v931, %v930
        %933 = vmatpush.bf16.msra.mxu0 0
        %934 = vmatpush.bf16.msra.mxu0 0
        %935 = vmatpush.bf16.msra.mxu0 0
        %936 = vmatpush.bf16.msra.mxu0 0
        %937 = vmatpush.bf16.msra.mxu0 0
        %938 = vmatpush.bf16.msra.mxu0 0
        %939 = vmatpush.bf16.msra.mxu0 0
        %940 = vmatpush.bf16.msra.mxu0 %v932
        %941 = vmatmul.bf16.gmra.mxu0 %v521
        %v942 = vpop.f32.mrf.mxu0
        %v943 = vadd.f32 %v456, %v942
        %v944 = vpop.f32.mrf.mxu0
        %v945 = vadd.f32 %v461, %v944
        %946 = vdwg.mxu0
        %v947 = vmax.f32 %v943, 0.0
        %v948 = vmax.f32 %v945, 0.0
        %v949 = vpack.c.bf16 %v948, %v947
        %950 = vmatpush.bf16.msra.mxu0 0
        %951 = vmatpush.bf16.msra.mxu0 0
        %952 = vmatpush.bf16.msra.mxu0 0
        %953 = vmatpush.bf16.msra.mxu0 0
        %954 = vmatpush.bf16.msra.mxu0 0
        %955 = vmatpush.bf16.msra.mxu0 0
        %956 = vmatpush.bf16.msra.mxu0 0
        %957 = vmatpush.bf16.msra.mxu0 %v949
        %958 = vmatmul.bf16.gmra.mxu0 %v551
        %v959 = vpop.f32.mrf.mxu0
        %v960 = vadd.f32 %v466, %v959
        %v961 = vpop.f32.mrf.mxu0
        %v962 = vadd.f32 %v471, %v961
        %963 = vmatmul.bf16.gmra.mxu0 %v554
        %v964 = vpop.f32.mrf.mxu0
        %v965 = vadd.f32 %v476, %v964
        %v966 = vpop.f32.mrf.mxu0
        %v967 = vadd.f32 %v481, %v966
        %968 = vdwg.mxu0
        %v969 = vmax.f32 %v960, 0.0
        %v970 = vmax.f32 %v962, 0.0
        %v971 = vmax.f32 %v965, 0.0
        %v972 = vmax.f32 %v967, 0.0
        %v973 = vpack.c.bf16 %v969, %v969
        %v974 = vpack.c.bf16 %v970, %v970
        %v975 = vpack.c.bf16 %v971, %v971
        %v976 = vpack.c.bf16 %v972, %v972
        %v977 = vunpack.c.l.bf16 %v907
        %v978 = vunpack.c.l.bf16 %v908
        %v979 = vunpack.c.l.bf16 %v909
        %v980 = vunpack.c.l.bf16 %v910
        %v981 = vunpack.c.l.bf16 %v973
        %v982 = vunpack.c.l.bf16 %v974
        %v983 = vunpack.c.l.bf16 %v975
        %v984 = vunpack.c.l.bf16 %v976
        %v985 = vmax.f32 %v977, %v981
        %v986 = vmax.f32 %v978, %v982
        %v987 = vmax.f32 %v979, %v983
        %v988 = vmax.f32 %v980, %v984
        %v989 = vpack.c.bf16 %v985, %v985
        %v990 = vpack.c.bf16 %v986, %v986
        %v991 = vpack.c.bf16 %v987, %v987
        %v992 = vpack.c.bf16 %v988, %v988
        %s993 = scalar_lea.vmem %s409, 24
        %v994 = vld [vmem:[%s993] sm:$0xf]
        %v996 = vsel %vm493, %v994, 0
        %998 = vmatpush.bf16.msra.mxu0 0
        %999 = vmatpush.bf16.msra.mxu0 0
        %1000 = vmatpush.bf16.msra.mxu0 0
        %1001 = vmatpush.bf16.msra.mxu0 0
        %1002 = vmatpush.bf16.msra.mxu0 0
        %1003 = vmatpush.bf16.msra.mxu0 0
        %1004 = vmatpush.bf16.msra.mxu0 0
        %1005 = vmatpush.bf16.msra.mxu0 %v996
        %1006 = vmatmul.bf16.gmra.mxu0 %v491
        %v1007 = vpop.f32.mrf.mxu0
        %v1008 = vadd.f32 %v446, %v1007
        %v1009 = vpop.f32.mrf.mxu0
        %v1010 = vadd.f32 %v451, %v1009
        %1011 = vdwg.mxu0
        %v1012 = vmax.f32 %v1008, 0.0
        %v1013 = vmax.f32 %v1010, 0.0
        %v1014 = vpack.c.bf16 %v1013, %v1012
        %1015 = vmatpush.bf16.msra.mxu0 0
        %1016 = vmatpush.bf16.msra.mxu0 0
        %1017 = vmatpush.bf16.msra.mxu0 0
        %1018 = vmatpush.bf16.msra.mxu0 0
        %1019 = vmatpush.bf16.msra.mxu0 0
        %1020 = vmatpush.bf16.msra.mxu0 0
        %1021 = vmatpush.bf16.msra.mxu0 0
        %1022 = vmatpush.bf16.msra.mxu0 %v1014
        %1023 = vmatmul.bf16.gmra.mxu0 %v521
        %v1024 = vpop.f32.mrf.mxu0
        %v1025 = vadd.f32 %v456, %v1024
        %v1026 = vpop.f32.mrf.mxu0
        %v1027 = vadd.f32 %v461, %v1026
        %1028 = vdwg.mxu0
        %v1029 = vmax.f32 %v1025, 0.0
        %v1030 = vmax.f32 %v1027, 0.0
        %v1031 = vpack.c.bf16 %v1030, %v1029
        %1032 = vmatpush.bf16.msra.mxu0 0
        %1033 = vmatpush.bf16.msra.mxu0 0
        %1034 = vmatpush.bf16.msra.mxu0 0
        %1035 = vmatpush.bf16.msra.mxu0 0
        %1036 = vmatpush.bf16.msra.mxu0 0
        %1037 = vmatpush.bf16.msra.mxu0 0
        %1038 = vmatpush.bf16.msra.mxu0 0
        %1039 = vmatpush.bf16.msra.mxu0 %v1031
        %1040 = vmatmul.bf16.gmra.mxu0 %v551
        %v1041 = vpop.f32.mrf.mxu0
        %v1042 = vadd.f32 %v466, %v1041
        %v1043 = vpop.f32.mrf.mxu0
        %v1044 = vadd.f32 %v471, %v1043
        %1045 = vmatmul.bf16.gmra.mxu0 %v554
        %v1046 = vpop.f32.mrf.mxu0
        %v1047 = vadd.f32 %v476, %v1046
        %v1048 = vpop.f32.mrf.mxu0
        %v1049 = vadd.f32 %v481, %v1048
        %1050 = vdwg.mxu0
        %v1051 = vmax.f32 %v1042, 0.0
        %v1052 = vmax.f32 %v1044, 0.0
        %v1053 = vmax.f32 %v1047, 0.0
        %v1054 = vmax.f32 %v1049, 0.0
        %v1055 = vpack.c.bf16 %v1051, %v1051
        %v1056 = vpack.c.bf16 %v1052, %v1052
        %v1057 = vpack.c.bf16 %v1053, %v1053
        %v1058 = vpack.c.bf16 %v1054, %v1054
        %v1059 = vunpack.c.l.bf16 %v989
        %v1060 = vunpack.c.l.bf16 %v990
        %v1061 = vunpack.c.l.bf16 %v991
        %v1062 = vunpack.c.l.bf16 %v992
        %v1063 = vunpack.c.l.bf16 %v1055
        %v1064 = vunpack.c.l.bf16 %v1056
        %v1065 = vunpack.c.l.bf16 %v1057
        %v1066 = vunpack.c.l.bf16 %v1058
        %v1067 = vmax.f32 %v1059, %v1063
        %v1068 = vmax.f32 %v1060, %v1064
        %v1069 = vmax.f32 %v1061, %v1065
        %v1070 = vmax.f32 %v1062, %v1066
        %v1071 = vpack.c.bf16 %v1067, %v1067
        %v1072 = vpack.c.bf16 %v1068, %v1068
        %v1073 = vpack.c.bf16 %v1069, %v1069
        %v1074 = vpack.c.bf16 %v1070, %v1070
        %s1075 = scalar_lea.vmem %s409, 28
        %v1076 = vld [vmem:[%s1075] sm:$0xf]
        %v1078 = vsel %vm493, %v1076, 0
        %1080 = vmatpush.bf16.msra.mxu0 0
        %1081 = vmatpush.bf16.msra.mxu0 0
        %1082 = vmatpush.bf16.msra.mxu0 0
        %1083 = vmatpush.bf16.msra.mxu0 0
        %1084 = vmatpush.bf16.msra.mxu0 0
        %1085 = vmatpush.bf16.msra.mxu0 0
        %1086 = vmatpush.bf16.msra.mxu0 0
        %1087 = vmatpush.bf16.msra.mxu0 %v1078
        %1088 = vmatmul.bf16.gmra.mxu0 %v491
        %v1089 = vpop.f32.mrf.mxu0
        %v1090 = vadd.f32 %v446, %v1089
        %v1091 = vpop.f32.mrf.mxu0
        %v1092 = vadd.f32 %v451, %v1091
        %1093 = vdwg.mxu0
        %v1094 = vmax.f32 %v1090, 0.0
        %v1095 = vmax.f32 %v1092, 0.0
        %v1096 = vpack.c.bf16 %v1095, %v1094
        %1097 = vmatpush.bf16.msra.mxu0 0
        %1098 = vmatpush.bf16.msra.mxu0 0
        %1099 = vmatpush.bf16.msra.mxu0 0
        %1100 = vmatpush.bf16.msra.mxu0 0
        %1101 = vmatpush.bf16.msra.mxu0 0
        %1102 = vmatpush.bf16.msra.mxu0 0
        %1103 = vmatpush.bf16.msra.mxu0 0
        %1104 = vmatpush.bf16.msra.mxu0 %v1096
        %1105 = vmatmul.bf16.gmra.mxu0 %v521
        %v1106 = vpop.f32.mrf.mxu0
        %v1107 = vadd.f32 %v456, %v1106
        %v1108 = vpop.f32.mrf.mxu0
        %v1109 = vadd.f32 %v461, %v1108
        %1110 = vdwg.mxu0
        %v1111 = vmax.f32 %v1107, 0.0
        %v1112 = vmax.f32 %v1109, 0.0
        %v1113 = vpack.c.bf16 %v1112, %v1111
        %1114 = vmatpush.bf16.msra.mxu0 0
        %1115 = vmatpush.bf16.msra.mxu0 0
        %1116 = vmatpush.bf16.msra.mxu0 0
        %1117 = vmatpush.bf16.msra.mxu0 0
        %1118 = vmatpush.bf16.msra.mxu0 0
        %1119 = vmatpush.bf16.msra.mxu0 0
        %1120 = vmatpush.bf16.msra.mxu0 0
        %1121 = vmatpush.bf16.msra.mxu0 %v1113
        %1122 = vmatmul.bf16.gmra.mxu0 %v551
        %v1123 = vpop.f32.mrf.mxu0
        %v1124 = vadd.f32 %v466, %v1123
        %v1125 = vpop.f32.mrf.mxu0
        %v1126 = vadd.f32 %v471, %v1125
        %1127 = vmatmul.bf16.gmra.mxu0 %v554
        %v1128 = vpop.f32.mrf.mxu0
        %v1129 = vadd.f32 %v476, %v1128
        %v1130 = vpop.f32.mrf.mxu0
        %v1131 = vadd.f32 %v481, %v1130
        %1132 = vdwg.mxu0
        %v1133 = vmax.f32 %v1124, 0.0
        %v1134 = vmax.f32 %v1126, 0.0
        %v1135 = vmax.f32 %v1129, 0.0
        %v1136 = vmax.f32 %v1131, 0.0
        %v1137 = vpack.c.bf16 %v1133, %v1133
        %v1138 = vpack.c.bf16 %v1134, %v1134
        %v1139 = vpack.c.bf16 %v1135, %v1135
        %v1140 = vpack.c.bf16 %v1136, %v1136
        %v1141 = vunpack.c.l.bf16 %v1071
        %v1142 = vunpack.c.l.bf16 %v1072
        %v1143 = vunpack.c.l.bf16 %v1073
        %v1144 = vunpack.c.l.bf16 %v1074
        %v1145 = vunpack.c.l.bf16 %v1137
        %v1146 = vunpack.c.l.bf16 %v1138
        %v1147 = vunpack.c.l.bf16 %v1139
        %v1148 = vunpack.c.l.bf16 %v1140
        %v1149 = vmax.f32 %v1141, %v1145
        %v1150 = vmax.f32 %v1142, %v1146
        %v1151 = vmax.f32 %v1143, %v1147
        %v1152 = vmax.f32 %v1144, %v1148
        %v1153 = vpack.c.bf16 %v1150, %v1149
        %v1154 = vpack.c.bf16 %v1152, %v1151
        %1156 = vset.pattern.permute.xlu0 0
        %1157 = vperm.xlu0 %1156, %v435
        %v1158 = vpop.permute.xlu0 %1157
        %1161 = vset.pattern.permute.xlu0 0
        %1162 = vperm.xlu0 %1161, %v436
        %v1163 = vpop.permute.xlu0 %1162
        %1166 = vset.pattern.permute.xlu0 0
        %1167 = vperm.xlu0 %1166, %v437
        %v1168 = vpop.permute.xlu0 %1167
        %1171 = vset.pattern.permute.xlu0 0
        %1172 = vperm.xlu0 %1171, %v438
        %v1173 = vpop.permute.xlu0 %1172
        %v1179 = vunpack.c.l.b16 %v427
        %v1180 = vunpack.c.l.b16 %v428
        %v1181 = vunpack.c.l.b16 %v429
        %v1182 = vunpack.c.l.b16 %v430
        %v1183 = vpack.c.b16 %v1180, %v1179
        %v1184 = vpack.c.b16 %v1182, %v1181
        %vm1185 = vcmask 261120
        %v1187 = vsel %vm1185, %v1183, 0
        %v1190 = vsel %vm1185, %v1184, 0
        %1192 = vmatpush.bf16.msra.mxu0 0
        %1193 = vmatpush.bf16.msra.mxu0 0
        %1194 = vmatpush.bf16.msra.mxu0 0
        %1195 = vmatpush.bf16.msra.mxu0 0
        %1196 = vmatpush.bf16.msra.mxu0 0
        %1197 = vmatpush.bf16.msra.mxu0 0
        %1198 = vmatpush.bf16.msra.mxu0 %v1154
        %1199 = vmatpush.bf16.msra.mxu0 %v1153
        %1200 = vmatmul.bf16.gmra.mxu0 %v1187
        %v1201 = vpop.f32.mrf.mxu0
        %v1202 = vadd.f32 %v1158, %v1201
        %v1203 = vpop.f32.mrf.mxu0
        %v1204 = vadd.f32 %v1163, %v1203
        %1205 = vmatmul.bf16.gmra.mxu0 %v1190
        %v1206 = vpop.f32.mrf.mxu0
        %v1207 = vadd.f32 %v1168, %v1206
        %v1208 = vpop.f32.mrf.mxu0
        %v1209 = vadd.f32 %v1173, %v1208
        %1210 = vdwg.mxu0
        %v1211 = vmax.f32 %v1202, 0.0
        %v1212 = vmax.f32 %v1204, 0.0
        %v1213 = vmax.f32 %v1207, 0.0
        %v1214 = vmax.f32 %v1209, 0.0
        %v1215 = vpack.c.bf16 %v1212, %v1211
        %v1216 = vpack.c.bf16 %v1214, %v1213
        %1218 = vset.pattern.permute.xlu0 0
        %1219 = vperm.xlu0 %1218, %v439
        %v1220 = vpop.permute.xlu0 %1219
        %1223 = vset.pattern.permute.xlu0 0
        %1224 = vperm.xlu0 %1223, %v440
        %v1225 = vpop.permute.xlu0 %1224
        %1228 = vset.pattern.permute.xlu0 0
        %1229 = vperm.xlu0 %1228, %v441
        %v1230 = vpop.permute.xlu0 %1229
        %1233 = vset.pattern.permute.xlu0 0
        %1234 = vperm.xlu0 %1233, %v442
        %v1235 = vpop.permute.xlu0 %1234
        %v1241 = vunpack.c.l.b16 %v431
        %v1242 = vunpack.c.l.b16 %v432
        %v1243 = vunpack.c.l.b16 %v433
        %v1244 = vunpack.c.l.b16 %v434
        %v1245 = vpack.c.b16 %v1242, %v1241
        %v1246 = vpack.c.b16 %v1244, %v1243
        %v1248 = vsel %vm1185, %v1245, 0
        %v1251 = vsel %vm1185, %v1246, 0
        %1253 = vmatpush.bf16.msra.mxu0 0
        %1254 = vmatpush.bf16.msra.mxu0 0
        %1255 = vmatpush.bf16.msra.mxu0 0
        %1256 = vmatpush.bf16.msra.mxu0 0
        %1257 = vmatpush.bf16.msra.mxu0 0
        %1258 = vmatpush.bf16.msra.mxu0 0
        %1259 = vmatpush.bf16.msra.mxu0 %v1216
        %1260 = vmatpush.bf16.msra.mxu0 %v1215
        %1261 = vmatmul.bf16.gmra.mxu0 %v1248
        %v1262 = vpop.f32.mrf.mxu0
        %v1263 = vadd.f32 %v1220, %v1262
        %v1264 = vpop.f32.mrf.mxu0
        %v1265 = vadd.f32 %v1225, %v1264
        %1266 = vmatmul.bf16.gmra.mxu0 %v1251
        %v1267 = vpop.f32.mrf.mxu0
        %v1268 = vadd.f32 %v1230, %v1267
        %v1269 = vpop.f32.mrf.mxu0
        %v1270 = vadd.f32 %v1235, %v1269
        %1271 = vdwg.mxu0
        %v1272 = vmax.f32 %v1263, 0.0
        %v1273 = vmax.f32 %v1265, 0.0
        %v1274 = vmax.f32 %v1268, 0.0
        %v1275 = vmax.f32 %v1270, 0.0
        %vm1276 = vcmask 523264
        %1277 = vst.msk [vmem:[%s401] sm:$0xff] %vm1276, %v1272
        %1278 = vst.msk [vmem:[%s401 + $0x8] sm:$0xff] %vm1276, %v1273
        %1279 = vst.msk [vmem:[%s401 + $0x10] sm:$0xff] %vm1276, %v1274
        %1280 = vst.msk [vmem:[%s401 + $0x18] sm:$0xff] %vm1276, %v1275
        %s1281 = sand.u32 %s285, 1
        %s1282 = scalar_lea.sflag [#allocation3], %s1281
        %s1283 = sand.u32 %s285, 1
        %s1284 = smul.addr %s1283, 32
        %s1285 = scalar_lea.vmem [#allocation2], %s1284
        // Predicated region
        $region65: #{tpu_custom_call.1} parent=63 // pred_check
          %p1286 = pneg %p295
        $region66: #{tpu_custom_call.1} parent=63 // pred_check_branch
          %1288 = sbr.rel (%p1286) target = $region68
        $region67: #{tpu_custom_call.1} parent=63 // pred_region
          %1290 = vsyncadd %s1282, 0
          %s1291 = smul.addr %s29, 4
          %s1292 = sadd.s32 %s30, %s1291
          %s1293 = smul.addr %s1292, 8
          %s1294 = scalar_lea.hbm %s11, %s1293
          %s1295 = sshll.u32 %s1285, 4
          %s1296 = int_to_ptr.vmem [resolvable:$true] %s1295
          %s1297 = sshll.u32 %s1294, 4
          %s1298 = int_to_ptr.hbm [resolvable:$true] %s1297
          %1303 = dma.vmem_to_hbm [thread:$0]  %s1296, 512, %s1298, %s1282, 128, 128, 8
        $region68: #{tpu_custom_call.1} parent=63 // pred_fallthru
          _
      $region64: #{tpu_custom_call.1} parent=5 // pred_fallthru
        _
      %p1304 = scmp.le.s32.totalorder 2, %s20
      // Predicated region
      $region69: #{tpu_custom_call.1} parent=5 // pred_check
        %p1305 = pneg %p1304
      $region70: #{tpu_custom_call.1} parent=5 // pred_check_branch
        %1307 = sbr.rel (%p1305) target = $region72
      $region71: #{tpu_custom_call.1} parent=5 // pred_region
        %s1308 = ssub.s32 %s20, 2
        // Predicated region
        $region73: #{tpu_custom_call.1} parent=71 // pred_check
          %p1309 = pneg %p301
        $region74: #{tpu_custom_call.1} parent=71 // pred_check_branch
          %1311 = sbr.rel (%p1309) target = $region76
        $region75: #{tpu_custom_call.1} parent=71 // pred_region
          %s1312 = sand.u32 %s286, 1
          %s1313 = scalar_lea.sflag [#allocation3], %s1312
          %s1314 = sand.u32 %s286, 1
          %s1315 = smul.addr %s1314, 32
          %s1316 = scalar_lea.vmem [#allocation2], %s1315
          %1318 = dma.done %s1313, 512
        $region76: #{tpu_custom_call.1} parent=71 // pred_fallthru
          _
      $region72: #{tpu_custom_call.1} parent=5 // pred_fallthru
        _
    $region6: #{tpu_custom_call.1} parent=1 // loop_footer
      %s24 = sadd.s32 1, %s20
    $region7: #{tpu_custom_call.1} parent=1 // loop_footer_branch
      %19 = sbr.rel target = $region3
    $region8: #{tpu_custom_call.1} parent=1 // loop_exit
      _
    %1319 = vsyncpa [#allocation3], 1
    %s1320 = scalar_lea.sflag [#allocation3], 1
    %1321 = vsyncpa %s1320, 1

</llo_original>
